<compile_context>
chip_gen: v7x
topology: tpu7x:2x2x1
jax: 0.10.0
libtpu: 0.0.40
codegen_flags: <defaults>
</compile_context>

<pallas_src>
import jax
import jax.numpy as jnp
from jax.experimental import pallas as pl
from jax.experimental.pallas import tpu as pltpu


def _make_block_kernel(eps: float):
    def kernel(x_ref,
               ln1w_ref, ln1b_ref,
               tmk_ref, tmv_ref, tmr_ref, we_ref,
               tm_wk_ref, tm_wv_ref, tm_wr_ref, tm_wo_ref,
               ln2w_ref, ln2b_ref,
               cmk_ref, cmr_ref,
               cm_wkey_ref, cm_wval_ref, cm_wr_ref,
               o_ref):
        bb, T, C = x_ref.shape
        rows = bb * T
        f32 = jnp.float32
        bf16 = jnp.bfloat16

        # Flatten to a lane-dense (rows, C) view; C is the lane (last) dim.
        x = x_ref[...].astype(f32).reshape(rows, C)

        def layer_norm(h, g, b):
            mu = jnp.mean(h, axis=-1, keepdims=True)
            hc = h - mu
            var = jnp.mean(hc * hc, axis=-1, keepdims=True)
            return hc * jax.lax.rsqrt(var + eps) * g + b

        def sig(z):  # exp + reciprocal both on the EUP slot
            return pl.reciprocal(1.0 + jnp.exp(-z), approx=True)

        def mm(a, w_ref_):  # bf16 operands -> MXU, f32 accumulation
            return jnp.dot(a.astype(bf16), w_ref_[...],
                           preferred_element_type=f32)

        # One-step causal time shift (nn.ZeroPad2d((0, 0, 1, -1))):
        #   shift(h)[b, t] = h[b, t-1];  shift(h)[b, 0] = 0.
        # Sublane roll of the flattened (rows, C) slab by one row, then zero
        # every row with t == 0 (which also kills the cross-batch wraparound).
        not_first = (jax.lax.broadcasted_iota(jnp.int32, (rows, C), 0) % T) != 0

        def time_shift(h2d):
            return jnp.where(not_first, pltpu.roll(h2d, shift=1, axis=0), 0.0)

        # ---------------- pre-norm + RWKV_TM (time-mix) branch ----------------
        ln1 = layer_norm(x, ln1w_ref[...].astype(f32), ln1b_ref[...].astype(f32))
        xx = time_shift(ln1)
        d1 = ln1 - xx                                    # hoisted lerp term
        xk = xx + d1 * tmk_ref[...].astype(f32)
        xv = xx + d1 * tmv_ref[...].astype(f32)
        xr = xx + d1 * tmr_ref[...].astype(f32)

        k = mm(xk, tm_wk_ref)
        v = mm(xv, tm_wv_ref)
        r = mm(xr, tm_wr_ref)

        # TODO(synk): the reference's F.conv1d(kv, self.we, groups=C) with a
        # rank-1 weight is not runnable as written in PyTorch; it is
        # interpreted here as the only shape-consistent reading: a depthwise
        # kernel-size-1 conv, i.e. per-channel scaling by `we`.
        we = we_ref[...].astype(f32)
        kwe = k * we
        rwkv = sig(r) * ((kwe * v) * pl.reciprocal(kwe, approx=True))
        x1 = x + mm(rwkv, tm_wo_ref)                     # first residual

        # ---------------- post-norm + RWKV_CM (channel-mix) branch ------------
        ln2 = layer_norm(x1, ln2w_ref[...].astype(f32), ln2b_ref[...].astype(f32))
        xx2 = time_shift(ln2)
        d2 = ln2 - xx2
        xk2 = xx2 + d2 * cmk_ref[...].astype(f32)
        xr2 = xx2 + d2 * cmr_ref[...].astype(f32)

        kk = mm(xk2, cm_wkey_ref)                        # (rows, 4C)
        kk = kk * sig(kk)                                # SiLU
        kv2 = mm(kk, cm_wval_ref)                        # (rows, C)
        sr2 = sig(mm(xr2, cm_wr_ref))

        y = x1 + sr2 * kv2                               # second residual
        o_ref[...] = y.reshape(bb, T, C).astype(o_ref.dtype)

    return kernel


def _vmem_limit_bytes() -> int:
    """~85% of this generation's physical VMEM (headroom for compiler scratch)."""
    phys = 64 << 20                      # conservative default (v7x per-TC)
    try:
        info = pltpu.get_tpu_info()
        phys = int(getattr(info, "vmem_capacity_bytes", phys))
    except Exception:
        pass
    return int(phys * 0.85)


def _const_spec(shape):
    """BlockSpec for a grid-invariant operand: constant index_map, single buffer."""
    idx = lambda i: (0,) * len(shape)    # noqa: E731
    try:
        return pl.BlockSpec(shape, idx, pipeline_mode=pl.Buffered(1))
    except Exception:                    # older signature without pipeline_mode
        return pl.BlockSpec(shape, idx)


def rwkv_gpt_block(x, params, *, eps: float = 1e-5):
    """Fused forward of RWKV_GPT_Block.

    x: (B, T, C).  Linear weights in `params` are stored (in_features,
    out_features), i.e. the transpose of the PyTorch nn.Linear layout, so the
    kernel computes x @ W directly.  Per-channel vectors have shape (C,).
    Matmuls run bf16 on the MXU with f32 accumulation; all other math is f32.
    """
    B, T, C = x.shape
    H = params["cm_key_w"].shape[1]

    # ---- VMEM-aware batch-slab selection --------------------------------
    vmem_limit = _vmem_limit_bytes()
    weight_bytes = (5 * C * C + 2 * C * H) * 2           # bf16, single-buffered
    vec_bytes = 9 * C * 4 * 2                            # (1,C) f32 vectors
    io_per_b = T * C * x.dtype.itemsize * 2 * 2          # in+out slabs, double-buffered
    act_per_b = (24 * C + 2 * H) * T * 4                 # live f32 intermediates (est.)
    per_b = io_per_b + act_per_b
    avail = max(vmem_limit - weight_bytes - vec_bytes, 0)

    # >=2 grid steps (ideally >=4) so the pipeline overlaps DMA with compute
    # and v7x's two TensorCores both get batch work.
    min_steps = min(B, 4) if B > 1 else 1
    bb = 1
    for d in range(1, B + 1):
        if B % d == 0 and d <= B // min_steps and d * per_b <= avail:
            bb = d
    # TODO(synk): if even bb=1 exceeds the budget (very long T / large C), add a
    # T grid axis with a 1-row carry for the time shift and stream the FFN /
    # projection weights from HBM (memory_space=pl.ANY + emit_pipeline).
    grid = (B // bb,)

    in_specs = [
        pl.BlockSpec((bb, T, C), lambda i: (i, 0, 0)),    # x (pipelined over batch)
        _const_spec((1, C)), _const_spec((1, C)),         # ln1 weight, bias
        _const_spec((1, C)), _const_spec((1, C)),         # tm mix k, v
        _const_spec((1, C)), _const_spec((1, C)),         # tm mix r, we
        _const_spec((C, C)), _const_spec((C, C)),         # tm k, v projections
        _const_spec((C, C)), _const_spec((C, C)),         # tm r, o projections
        _const_spec((1, C)), _const_spec((1, C)),         # ln2 weight, bias
        _const_spec((1, C)), _const_spec((1, C)),         # cm mix k, r
        _const_spec((C, H)), _const_spec((H, C)),         # cm key, value projections
        _const_spec((C, C)),                              # cm r projection
    ]

    r1 = lambda a: a.astype(jnp.float32).reshape(1, C)    # noqa: E731
    wb = lambda a: a.astype(jnp.bfloat16)                 # noqa: E731  (host-side cast)
    args = (
        x,
        r1(params["ln1_w"]), r1(params["ln1_b"]),
        r1(params["tm_mix_k"]), r1(params["tm_mix_v"]), r1(params["tm_mix_r"]),
        r1(params["tm_we"]),
        wb(params["tm_k_w"]), wb(params["tm_v_w"]),
        wb(params["tm_r_w"]), wb(params["tm_o_w"]),
        r1(params["ln2_w"]), r1(params["ln2_b"]),
        r1(params["cm_mix_k"]), r1(params["cm_mix_r"]),
        wb(params["cm_key_w"]), wb(params["cm_value_w"]), wb(params["cm_r_w"]),
    )

    return pl.pallas_call(
        _make_block_kernel(eps),
        out_shape=jax.ShapeDtypeStruct((B, T, C), x.dtype),
        grid_spec=pltpu.PrefetchScalarGridSpec(
            num_scalar_prefetch=0,
            grid=grid,
            in_specs=in_specs,
            out_specs=pl.BlockSpec((bb, T, C), lambda i: (i, 0, 0)),
        ),
        compiler_params=pltpu.CompilerParams(
            dimension_semantics=("parallel",),   # batch axis: megacore-splittable
            vmem_limit_bytes=vmem_limit,
        ),
    )(*args)


def rwkv_gpt_block_ref(x, params, eps: float = 1e-5):
    """Plain-JAX reference; matmuls use the same bf16-operand / f32-acc path."""
    p = {k: v.astype(jnp.float32) for k, v in params.items()}
    xf = x.astype(jnp.float32)

    def layer_norm(h, g, b):
        mu = jnp.mean(h, axis=-1, keepdims=True)
        hc = h - mu
        var = jnp.mean(hc * hc, axis=-1, keepdims=True)
        return hc * jax.lax.rsqrt(var + eps) * g + b

    def time_shift(h):  # nn.ZeroPad2d((0, 0, 1, -1))
        return jnp.pad(h, ((0, 0), (1, 0), (0, 0)))[:, :-1, :]

    def mm(a, w):
        return jnp.dot(a.astype(jnp.bfloat16), w.astype(jnp.bfloat16),
                       preferred_element_type=jnp.float32)

    sig = lambda z: 1.0 / (1.0 + jnp.exp(-z))  # noqa: E731

    ln1 = layer_norm(xf, p["ln1_w"], p["ln1_b"])
    xx = time_shift(ln1)
    xk = ln1 * p["tm_mix_k"] + xx * (1 - p["tm_mix_k"])
    xv = ln1 * p["tm_mix_v"] + xx * (1 - p["tm_mix_v"])
    xr = ln1 * p["tm_mix_r"] + xx * (1 - p["tm_mix_r"])
    k = mm(xk, p["tm_k_w"])
    v = mm(xv, p["tm_v_w"])
    r = mm(xr, p["tm_r_w"])
    kv = k * v
    rwkv = sig(r) * ((kv * p["tm_we"]) / (k * p["tm_we"]))
    x1 = xf + mm(rwkv, p["tm_o_w"])

    ln2 = layer_norm(x1, p["ln2_w"], p["ln2_b"])
    xx2 = time_shift(ln2)
    xk2 = ln2 * p["cm_mix_k"] + xx2 * (1 - p["cm_mix_k"])
    xr2 = ln2 * p["cm_mix_r"] + xx2 * (1 - p["cm_mix_r"])
    kk = mm(xk2, p["cm_key_w"])
    kk = kk * sig(kk)
    out = sig(mm(xr2, p["cm_r_w"])) * mm(kk, p["cm_value_w"])
    return x1 + out


if __name__ == "__main__":
    # Small config consistent with the module: hidden_size=32, seq=8, batch=2,
    # number_of_layers=8, block index=0, eps=1e-5.
    batch, seq, hidden = 2, 8, 32
    layers, index = 8, 0
    eps = 1e-5
    h_up = 4 * hidden

    key = jax.random.PRNGKey(0)
    keys = jax.random.split(key, 10)
    x = jax.random.normal(keys[0], (batch, seq, hidden), dtype=jnp.float32)

    pos = jnp.arange(hidden, dtype=jnp.float32) / hidden
    ratio_0_to_1 = index / (layers - 1)        # 0.0
    ratio_1_to_pz = 1.0 - index / layers       # 1.0

    def linear_w(k, fan_in, fan_out):
        # PyTorch nn.Linear default init, stored (in, out) so kernel does x @ W.
        bound = 1.0 / (fan_in ** 0.5)
        return jax.random.uniform(k, (fan_in, fan_out), jnp.float32, -bound, bound)

    params = dict(
        ln1_w=jnp.ones((hidden,), jnp.float32),
        ln1_b=jnp.zeros((hidden,), jnp.float32),
        tm_mix_k=pos ** ratio_1_to_pz,
        tm_mix_v=pos ** ratio_1_to_pz + 0.3 * ratio_0_to_1,
        tm_mix_r=pos ** (0.5 * ratio_1_to_pz),
        # NOTE: the module's own decay_speed init makes we[0] == 0, which turns
        # its forward (wkv/wk) into 0/0; use a strictly-positive deterministic
        # init for the demo instead.
        tm_we=0.5 + jax.random.uniform(keys[1], (hidden,), jnp.float32),
        tm_k_w=linear_w(keys[2], hidden, hidden),
        tm_v_w=linear_w(keys[3], hidden, hidden),
        tm_r_w=linear_w(keys[4], hidden, hidden),
        tm_o_w=linear_w(keys[5], hidden, hidden),
        ln2_w=jnp.ones((hidden,), jnp.float32),
        ln2_b=jnp.zeros((hidden,), jnp.float32),
        cm_mix_k=pos ** (1.0 - index / layers),
        cm_mix_r=pos ** (1.0 - index / layers),
        cm_key_w=linear_w(keys[6], hidden, h_up),
        cm_value_w=linear_w(keys[7], h_up, hidden),
        cm_r_w=linear_w(keys[8], hidden, hidden),
    )

    y = rwkv_gpt_block(x, params, eps=eps)
    jax.block_until_ready(y)

    ref = rwkv_gpt_block_ref(x, params, eps=eps)
    assert y.shape == x.shape and y.dtype == x.dtype
    max_err = float(jnp.max(jnp.abs(y.astype(jnp.float32) - ref)))
    # Tolerance absorbs only approx-reciprocal / op-ordering differences: the
    # reference uses the same bf16-operand MXU path, so semantic bugs are O(1).
    assert max_err < 2e-2, f"max abs error {max_err}"
    print("KERNEL_OK")
</pallas_src>

<mosaic_0001>
module attributes {stable_mosaic.version = 11 : i64} {
  func.func @kernel(%arg0: i32, %arg1: memref<1x8x32xf32, #tpu.memory_space<vmem>>, %arg2: memref<1x32xf32, #tpu.memory_space<vmem>>, %arg3: memref<1x32xf32, #tpu.memory_space<vmem>>, %arg4: memref<1x32xf32, #tpu.memory_space<vmem>>, %arg5: memref<1x32xf32, #tpu.memory_space<vmem>>, %arg6: memref<1x32xf32, #tpu.memory_space<vmem>>, %arg7: memref<1x32xf32, #tpu.memory_space<vmem>>, %arg8: memref<32x32xbf16, #tpu.memory_space<vmem>>, %arg9: memref<32x32xbf16, #tpu.memory_space<vmem>>, %arg10: memref<32x32xbf16, #tpu.memory_space<vmem>>, %arg11: memref<32x32xbf16, #tpu.memory_space<vmem>>, %arg12: memref<1x32xf32, #tpu.memory_space<vmem>>, %arg13: memref<1x32xf32, #tpu.memory_space<vmem>>, %arg14: memref<1x32xf32, #tpu.memory_space<vmem>>, %arg15: memref<1x32xf32, #tpu.memory_space<vmem>>, %arg16: memref<32x128xbf16, #tpu.memory_space<vmem>>, %arg17: memref<128x32xbf16, #tpu.memory_space<vmem>>, %arg18: memref<32x32xbf16, #tpu.memory_space<vmem>>, %arg19: memref<1x8x32xf32, #tpu.memory_space<vmem>>) attributes {dimension_semantics = [#tpu.dimension_semantics<parallel>], iteration_bounds = array<i64: 2>, scalar_prefetch = 0 : i64, scratch_operands = 0 : i64, tpu.core_type = #tpu.core_type<tc>, window_params = [{transform_indices = @transform_0, window_bounds = array<i64: 1, 8, 32>}, {pipeline_mode = #tpu.pipeline_mode<synchronous>, transform_indices = @transform_1, window_bounds = array<i64: 1, 32>}, {pipeline_mode = #tpu.pipeline_mode<synchronous>, transform_indices = @transform_2, window_bounds = array<i64: 1, 32>}, {pipeline_mode = #tpu.pipeline_mode<synchronous>, transform_indices = @transform_3, window_bounds = array<i64: 1, 32>}, {pipeline_mode = #tpu.pipeline_mode<synchronous>, transform_indices = @transform_4, window_bounds = array<i64: 1, 32>}, {pipeline_mode = #tpu.pipeline_mode<synchronous>, transform_indices = @transform_5, window_bounds = array<i64: 1, 32>}, {pipeline_mode = #tpu.pipeline_mode<synchronous>, transform_indices = @transform_6, window_bounds = array<i64: 1, 32>}, {pipeline_mode = #tpu.pipeline_mode<synchronous>, transform_indices = @transform_7, window_bounds = array<i64: 32, 32>}, {pipeline_mode = #tpu.pipeline_mode<synchronous>, transform_indices = @transform_8, window_bounds = array<i64: 32, 32>}, {pipeline_mode = #tpu.pipeline_mode<synchronous>, transform_indices = @transform_9, window_bounds = array<i64: 32, 32>}, {pipeline_mode = #tpu.pipeline_mode<synchronous>, transform_indices = @transform_10, window_bounds = array<i64: 32, 32>}, {pipeline_mode = #tpu.pipeline_mode<synchronous>, transform_indices = @transform_11, window_bounds = array<i64: 1, 32>}, {pipeline_mode = #tpu.pipeline_mode<synchronous>, transform_indices = @transform_12, window_bounds = array<i64: 1, 32>}, {pipeline_mode = #tpu.pipeline_mode<synchronous>, transform_indices = @transform_13, window_bounds = array<i64: 1, 32>}, {pipeline_mode = #tpu.pipeline_mode<synchronous>, transform_indices = @transform_14, window_bounds = array<i64: 1, 32>}, {pipeline_mode = #tpu.pipeline_mode<synchronous>, transform_indices = @transform_15, window_bounds = array<i64: 32, 128>}, {pipeline_mode = #tpu.pipeline_mode<synchronous>, transform_indices = @transform_16, window_bounds = array<i64: 128, 32>}, {pipeline_mode = #tpu.pipeline_mode<synchronous>, transform_indices = @transform_17, window_bounds = array<i64: 32, 32>}, {transform_indices = @transform_18, window_bounds = array<i64: 1, 8, 32>}]} {
    %c0 = arith.constant 0 : index
    %c0_0 = arith.constant 0 : index
    %c0_1 = arith.constant 0 : index
    %0 = vector.load %arg1[%c0, %c0_0, %c0_1] : memref<1x8x32xf32, #tpu.memory_space<vmem>>, vector<1x8x32xf32>
    %1 = vector.shape_cast %0 : vector<1x8x32xf32> to vector<8x32xf32>
    %2 = tpu.iota {dimensions = array<i32: 0>} : vector<8x32xi32>
    %c8_i32 = arith.constant 8 : i32
    %c0_i32 = arith.constant 0 : i32
    %3 = arith.cmpi eq, %c8_i32, %c0_i32 : i32
    %c1_i32 = arith.constant 1 : i32
    %4 = arith.select %3, %c1_i32, %c8_i32 : i32
    %5 = vector.broadcast %4 : i32 to vector<8x32xi32>
    %6 = arith.remsi %2, %5 : vector<8x32xi32>
    %c0_i32_2 = arith.constant 0 : i32
    %7 = vector.broadcast %c0_i32_2 : i32 to vector<8x32xi32>
    %8 = arith.cmpi ne, %6, %7 : vector<8x32xi32>
    %c0_i32_3 = arith.constant 0 : i32
    %9 = vector.broadcast %c0_i32_3 : i32 to vector<8x32xi32>
    %10 = arith.cmpi slt, %6, %9 : vector<8x32xi32>
    %c0_i32_4 = arith.constant 0 : i32
    %11 = arith.cmpi slt, %4, %c0_i32_4 : i32
    %12 = vector.broadcast %11 : i1 to vector<8x32xi1>
    %13 = vector.broadcast %12 : vector<8x32xi1> to vector<8x32xi1>
    %14 = arith.xori %10, %13 : vector<8x32xi1>
    %15 = arith.andi %14, %8 : vector<8x32xi1>
    %16 = vector.broadcast %4 : i32 to vector<8x32xi32>
    %17 = arith.addi %6, %16 : vector<8x32xi32>
    %18 = arith.select %15, %17, %6 : vector<8x32xi1>, vector<8x32xi32>
    %c0_i32_5 = arith.constant 0 : i32
    %19 = vector.broadcast %c0_i32_5 : i32 to vector<8x32xi32>
    %20 = arith.cmpi ne, %18, %19 : vector<8x32xi32>
    %c0_6 = arith.constant 0 : index
    %c0_7 = arith.constant 0 : index
    %21 = vector.load %arg2[%c0_6, %c0_7] : memref<1x32xf32, #tpu.memory_space<vmem>>, vector<1x32xf32>
    %c0_8 = arith.constant 0 : index
    %c0_9 = arith.constant 0 : index
    %22 = vector.load %arg3[%c0_8, %c0_9] : memref<1x32xf32, #tpu.memory_space<vmem>>, vector<1x32xf32>
    %cst = arith.constant dense<0.000000e+00> : vector<8xf32>
    %23 = vector.multi_reduction <add>, %1, %cst [1] : vector<8x32xf32> to vector<8xf32>
    %24 = vector.shape_cast %23 : vector<8xf32> to vector<8x1xf32>
    %cst_10 = arith.constant 3.200000e+01 : f32
    %25 = vector.broadcast %cst_10 : f32 to vector<8x1xf32>
    %26 = arith.divf %24, %25 : vector<8x1xf32>
    %27 = vector.broadcast %26 : vector<8x1xf32> to vector<8x32xf32>
    %28 = arith.subf %1, %27 : vector<8x32xf32>
    %29 = arith.mulf %28, %28 : vector<8x32xf32>
    %cst_11 = arith.constant dense<0.000000e+00> : vector<8xf32>
    %30 = vector.multi_reduction <add>, %29, %cst_11 [1] : vector<8x32xf32> to vector<8xf32>
    %31 = vector.shape_cast %30 : vector<8xf32> to vector<8x1xf32>
    %cst_12 = arith.constant 3.200000e+01 : f32
    %32 = vector.broadcast %cst_12 : f32 to vector<8x1xf32>
    %33 = arith.divf %31, %32 : vector<8x1xf32>
    %cst_13 = arith.constant 9.99999974E-6 : f32
    %34 = vector.broadcast %cst_13 : f32 to vector<8x1xf32>
    %35 = arith.addf %33, %34 : vector<8x1xf32>
    %36 = math.rsqrt %35 : vector<8x1xf32>
    %37 = vector.broadcast %36 : vector<8x1xf32> to vector<8x32xf32>
    %38 = arith.mulf %28, %37 : vector<8x32xf32>
    %39 = vector.broadcast %21 : vector<1x32xf32> to vector<8x32xf32>
    %40 = arith.mulf %38, %39 : vector<8x32xf32>
    %41 = vector.broadcast %22 : vector<1x32xf32> to vector<8x32xf32>
    %42 = arith.addf %40, %41 : vector<8x32xf32>
    %c1_i32_14 = arith.constant 1 : i32
    %43 = tpu.dynamic_rotate %42 by %c1_i32_14 dim 0 : vector<8x32xf32>, i32 -> vector<8x32xf32>
    %cst_15 = arith.constant 0.000000e+00 : f32
    %44 = vector.broadcast %cst_15 : f32 to vector<8x32xf32>
    %45 = arith.select %20, %43, %44 : vector<8x32xi1>, vector<8x32xf32>
    %46 = arith.subf %42, %45 : vector<8x32xf32>
    %c0_16 = arith.constant 0 : index
    %c0_17 = arith.constant 0 : index
    %47 = vector.load %arg4[%c0_16, %c0_17] : memref<1x32xf32, #tpu.memory_space<vmem>>, vector<1x32xf32>
    %48 = vector.broadcast %47 : vector<1x32xf32> to vector<8x32xf32>
    %49 = arith.mulf %46, %48 : vector<8x32xf32>
    %50 = arith.addf %45, %49 : vector<8x32xf32>
    %c0_18 = arith.constant 0 : index
    %c0_19 = arith.constant 0 : index
    %51 = vector.load %arg5[%c0_18, %c0_19] : memref<1x32xf32, #tpu.memory_space<vmem>>, vector<1x32xf32>
    %52 = vector.broadcast %51 : vector<1x32xf32> to vector<8x32xf32>
    %53 = arith.mulf %46, %52 : vector<8x32xf32>
    %54 = arith.addf %45, %53 : vector<8x32xf32>
    %c0_20 = arith.constant 0 : index
    %c0_21 = arith.constant 0 : index
    %55 = vector.load %arg6[%c0_20, %c0_21] : memref<1x32xf32, #tpu.memory_space<vmem>>, vector<1x32xf32>
    %56 = vector.broadcast %55 : vector<1x32xf32> to vector<8x32xf32>
    %57 = arith.mulf %46, %56 : vector<8x32xf32>
    %58 = arith.addf %45, %57 : vector<8x32xf32>
    %59 = arith.truncf %50 : vector<8x32xf32> to vector<8x32xbf16>
    %c0_22 = arith.constant 0 : index
    %c0_23 = arith.constant 0 : index
    %60 = vector.load %arg8[%c0_22, %c0_23] : memref<32x32xbf16, #tpu.memory_space<vmem>>, vector<32x32xbf16>
    %cst_24 = arith.constant dense<0.000000e+00> : vector<8x32xf32>
    %61 = tpu.matmul %59, %60, %cst_24 {dimension_numbers = #tpu.dot_dimension_numbers<[1], [0], [0], [1], [0, 0, 1, 1], [], []>} : vector<8x32xbf16>, vector<32x32xbf16>, vector<8x32xf32> -> vector<8x32xf32>
    %62 = arith.truncf %54 : vector<8x32xf32> to vector<8x32xbf16>
    %c0_25 = arith.constant 0 : index
    %c0_26 = arith.constant 0 : index
    %63 = vector.load %arg9[%c0_25, %c0_26] : memref<32x32xbf16, #tpu.memory_space<vmem>>, vector<32x32xbf16>
    %cst_27 = arith.constant dense<0.000000e+00> : vector<8x32xf32>
    %64 = tpu.matmul %62, %63, %cst_27 {dimension_numbers = #tpu.dot_dimension_numbers<[1], [0], [0], [1], [0, 0, 1, 1], [], []>} : vector<8x32xbf16>, vector<32x32xbf16>, vector<8x32xf32> -> vector<8x32xf32>
    %65 = arith.truncf %58 : vector<8x32xf32> to vector<8x32xbf16>
    %c0_28 = arith.constant 0 : index
    %c0_29 = arith.constant 0 : index
    %66 = vector.load %arg10[%c0_28, %c0_29] : memref<32x32xbf16, #tpu.memory_space<vmem>>, vector<32x32xbf16>
    %cst_30 = arith.constant dense<0.000000e+00> : vector<8x32xf32>
    %67 = tpu.matmul %65, %66, %cst_30 {dimension_numbers = #tpu.dot_dimension_numbers<[1], [0], [0], [1], [0, 0, 1, 1], [], []>} : vector<8x32xbf16>, vector<32x32xbf16>, vector<8x32xf32> -> vector<8x32xf32>
    %c0_31 = arith.constant 0 : index
    %c0_32 = arith.constant 0 : index
    %68 = vector.load %arg7[%c0_31, %c0_32] : memref<1x32xf32, #tpu.memory_space<vmem>>, vector<1x32xf32>
    %69 = vector.broadcast %68 : vector<1x32xf32> to vector<8x32xf32>
    %70 = arith.mulf %61, %69 : vector<8x32xf32>
    %cst_33 = arith.constant 0.000000e+00 : f32
    %71 = vector.broadcast %cst_33 : f32 to vector<8x32xf32>
    %72 = arith.subf %71, %67 : vector<8x32xf32>
    %73 = math.exp %72 : vector<8x32xf32>
    %cst_34 = arith.constant 1.000000e+00 : f32
    %74 = vector.broadcast %cst_34 : f32 to vector<8x32xf32>
    %75 = arith.addf %74, %73 : vector<8x32xf32>
    %76 = tpu.reciprocal %75 {approx = true} : vector<8x32xf32> -> vector<8x32xf32>
    %77 = arith.mulf %70, %64 : vector<8x32xf32>
    %78 = tpu.reciprocal %70 {approx = true} : vector<8x32xf32> -> vector<8x32xf32>
    %79 = arith.mulf %77, %78 : vector<8x32xf32>
    %80 = arith.mulf %76, %79 : vector<8x32xf32>
    %81 = arith.truncf %80 : vector<8x32xf32> to vector<8x32xbf16>
    %c0_35 = arith.constant 0 : index
    %c0_36 = arith.constant 0 : index
    %82 = vector.load %arg11[%c0_35, %c0_36] : memref<32x32xbf16, #tpu.memory_space<vmem>>, vector<32x32xbf16>
    %cst_37 = arith.constant dense<0.000000e+00> : vector<8x32xf32>
    %83 = tpu.matmul %81, %82, %cst_37 {dimension_numbers = #tpu.dot_dimension_numbers<[1], [0], [0], [1], [0, 0, 1, 1], [], []>} : vector<8x32xbf16>, vector<32x32xbf16>, vector<8x32xf32> -> vector<8x32xf32>
    %84 = arith.addf %1, %83 : vector<8x32xf32>
    %c0_38 = arith.constant 0 : index
    %c0_39 = arith.constant 0 : index
    %85 = vector.load %arg12[%c0_38, %c0_39] : memref<1x32xf32, #tpu.memory_space<vmem>>, vector<1x32xf32>
    %c0_40 = arith.constant 0 : index
    %c0_41 = arith.constant 0 : index
    %86 = vector.load %arg13[%c0_40, %c0_41] : memref<1x32xf32, #tpu.memory_space<vmem>>, vector<1x32xf32>
    %cst_42 = arith.constant dense<0.000000e+00> : vector<8xf32>
    %87 = vector.multi_reduction <add>, %84, %cst_42 [1] : vector<8x32xf32> to vector<8xf32>
    %88 = vector.shape_cast %87 : vector<8xf32> to vector<8x1xf32>
    %cst_43 = arith.constant 3.200000e+01 : f32
    %89 = vector.broadcast %cst_43 : f32 to vector<8x1xf32>
    %90 = arith.divf %88, %89 : vector<8x1xf32>
    %91 = vector.broadcast %90 : vector<8x1xf32> to vector<8x32xf32>
    %92 = arith.subf %84, %91 : vector<8x32xf32>
    %93 = arith.mulf %92, %92 : vector<8x32xf32>
    %cst_44 = arith.constant dense<0.000000e+00> : vector<8xf32>
    %94 = vector.multi_reduction <add>, %93, %cst_44 [1] : vector<8x32xf32> to vector<8xf32>
    %95 = vector.shape_cast %94 : vector<8xf32> to vector<8x1xf32>
    %cst_45 = arith.constant 3.200000e+01 : f32
    %96 = vector.broadcast %cst_45 : f32 to vector<8x1xf32>
    %97 = arith.divf %95, %96 : vector<8x1xf32>
    %cst_46 = arith.constant 9.99999974E-6 : f32
    %98 = vector.broadcast %cst_46 : f32 to vector<8x1xf32>
    %99 = arith.addf %97, %98 : vector<8x1xf32>
    %100 = math.rsqrt %99 : vector<8x1xf32>
    %101 = vector.broadcast %100 : vector<8x1xf32> to vector<8x32xf32>
    %102 = arith.mulf %92, %101 : vector<8x32xf32>
    %103 = vector.broadcast %85 : vector<1x32xf32> to vector<8x32xf32>
    %104 = arith.mulf %102, %103 : vector<8x32xf32>
    %105 = vector.broadcast %86 : vector<1x32xf32> to vector<8x32xf32>
    %106 = arith.addf %104, %105 : vector<8x32xf32>
    %c1_i32_47 = arith.constant 1 : i32
    %107 = tpu.dynamic_rotate %106 by %c1_i32_47 dim 0 : vector<8x32xf32>, i32 -> vector<8x32xf32>
    %cst_48 = arith.constant 0.000000e+00 : f32
    %108 = vector.broadcast %cst_48 : f32 to vector<8x32xf32>
    %109 = arith.select %20, %107, %108 : vector<8x32xi1>, vector<8x32xf32>
    %110 = arith.subf %106, %109 : vector<8x32xf32>
    %c0_49 = arith.constant 0 : index
    %c0_50 = arith.constant 0 : index
    %111 = vector.load %arg14[%c0_49, %c0_50] : memref<1x32xf32, #tpu.memory_space<vmem>>, vector<1x32xf32>
    %112 = vector.broadcast %111 : vector<1x32xf32> to vector<8x32xf32>
    %113 = arith.mulf %110, %112 : vector<8x32xf32>
    %114 = arith.addf %109, %113 : vector<8x32xf32>
    %c0_51 = arith.constant 0 : index
    %c0_52 = arith.constant 0 : index
    %115 = vector.load %arg15[%c0_51, %c0_52] : memref<1x32xf32, #tpu.memory_space<vmem>>, vector<1x32xf32>
    %116 = vector.broadcast %115 : vector<1x32xf32> to vector<8x32xf32>
    %117 = arith.mulf %110, %116 : vector<8x32xf32>
    %118 = arith.addf %109, %117 : vector<8x32xf32>
    %119 = arith.truncf %114 : vector<8x32xf32> to vector<8x32xbf16>
    %c0_53 = arith.constant 0 : index
    %c0_54 = arith.constant 0 : index
    %120 = vector.load %arg16[%c0_53, %c0_54] : memref<32x128xbf16, #tpu.memory_space<vmem>>, vector<32x128xbf16>
    %cst_55 = arith.constant dense<0.000000e+00> : vector<8x128xf32>
    %121 = tpu.matmul %119, %120, %cst_55 {dimension_numbers = #tpu.dot_dimension_numbers<[1], [0], [0], [1], [0, 0, 1, 1], [], []>} : vector<8x32xbf16>, vector<32x128xbf16>, vector<8x128xf32> -> vector<8x128xf32>
    %cst_56 = arith.constant 0.000000e+00 : f32
    %122 = vector.broadcast %cst_56 : f32 to vector<8x128xf32>
    %123 = arith.subf %122, %121 : vector<8x128xf32>
    %124 = math.exp %123 : vector<8x128xf32>
    %cst_57 = arith.constant 1.000000e+00 : f32
    %125 = vector.broadcast %cst_57 : f32 to vector<8x128xf32>
    %126 = arith.addf %125, %124 : vector<8x128xf32>
    %127 = tpu.reciprocal %126 {approx = true} : vector<8x128xf32> -> vector<8x128xf32>
    %128 = arith.mulf %121, %127 : vector<8x128xf32>
    %129 = arith.truncf %128 : vector<8x128xf32> to vector<8x128xbf16>
    %c0_58 = arith.constant 0 : index
    %c0_59 = arith.constant 0 : index
    %130 = vector.load %arg17[%c0_58, %c0_59] : memref<128x32xbf16, #tpu.memory_space<vmem>>, vector<128x32xbf16>
    %cst_60 = arith.constant dense<0.000000e+00> : vector<8x32xf32>
    %131 = tpu.matmul %129, %130, %cst_60 {dimension_numbers = #tpu.dot_dimension_numbers<[1], [0], [0], [1], [0, 0, 1, 1], [], []>} : vector<8x128xbf16>, vector<128x32xbf16>, vector<8x32xf32> -> vector<8x32xf32>
    %132 = arith.truncf %118 : vector<8x32xf32> to vector<8x32xbf16>
    %c0_61 = arith.constant 0 : index
    %c0_62 = arith.constant 0 : index
    %133 = vector.load %arg18[%c0_61, %c0_62] : memref<32x32xbf16, #tpu.memory_space<vmem>>, vector<32x32xbf16>
    %cst_63 = arith.constant dense<0.000000e+00> : vector<8x32xf32>
    %134 = tpu.matmul %132, %133, %cst_63 {dimension_numbers = #tpu.dot_dimension_numbers<[1], [0], [0], [1], [0, 0, 1, 1], [], []>} : vector<8x32xbf16>, vector<32x32xbf16>, vector<8x32xf32> -> vector<8x32xf32>
    %cst_64 = arith.constant 0.000000e+00 : f32
    %135 = vector.broadcast %cst_64 : f32 to vector<8x32xf32>
    %136 = arith.subf %135, %134 : vector<8x32xf32>
    %137 = math.exp %136 : vector<8x32xf32>
    %cst_65 = arith.constant 1.000000e+00 : f32
    %138 = vector.broadcast %cst_65 : f32 to vector<8x32xf32>
    %139 = arith.addf %138, %137 : vector<8x32xf32>
    %140 = tpu.reciprocal %139 {approx = true} : vector<8x32xf32> -> vector<8x32xf32>
    %141 = arith.mulf %140, %131 : vector<8x32xf32>
    %142 = arith.addf %84, %141 : vector<8x32xf32>
    %143 = vector.shape_cast %142 : vector<8x32xf32> to vector<1x8x32xf32>
    %c0_66 = arith.constant 0 : index
    %c0_67 = arith.constant 0 : index
    %c0_68 = arith.constant 0 : index
    %144 = vector.load %arg19[%c0_66, %c0_67, %c0_68] : memref<1x8x32xf32, #tpu.memory_space<vmem>>, vector<1x8x32xf32>
    tpu.vector_store %arg19[%c0_66, %c0_67, %c0_68], %143 {strides = array<i32>} : memref<1x8x32xf32, #tpu.memory_space<vmem>>, vector<1x8x32xf32>,
    return
  }
  func.func @transform_0(%arg0: i32) -> (i32, i32, i32) {
    %c0_i32 = arith.constant 0 : i32
    %c0_i32_0 = arith.constant 0 : i32
    %c0_i32_1 = arith.constant 0 : i32
    return %arg0, %c0_i32, %c0_i32_0 : i32, i32, i32
  }
  func.func @transform_1(%arg0: i32) -> (i32, i32) {
    %c0_i32 = arith.constant 0 : i32
    %c0_i32_0 = arith.constant 0 : i32
    %c0_i32_1 = arith.constant 0 : i32
    return %c0_i32, %c0_i32_0 : i32, i32
  }
  func.func @transform_2(%arg0: i32) -> (i32, i32) {
    %c0_i32 = arith.constant 0 : i32
    %c0_i32_0 = arith.constant 0 : i32
    %c0_i32_1 = arith.constant 0 : i32
    return %c0_i32, %c0_i32_0 : i32, i32
  }
  func.func @transform_3(%arg0: i32) -> (i32, i32) {
    %c0_i32 = arith.constant 0 : i32
    %c0_i32_0 = arith.constant 0 : i32
    %c0_i32_1 = arith.constant 0 : i32
    return %c0_i32, %c0_i32_0 : i32, i32
  }
  func.func @transform_4(%arg0: i32) -> (i32, i32) {
    %c0_i32 = arith.constant 0 : i32
    %c0_i32_0 = arith.constant 0 : i32
    %c0_i32_1 = arith.constant 0 : i32
    return %c0_i32, %c0_i32_0 : i32, i32
  }
  func.func @transform_5(%arg0: i32) -> (i32, i32) {
    %c0_i32 = arith.constant 0 : i32
    %c0_i32_0 = arith.constant 0 : i32
    %c0_i32_1 = arith.constant 0 : i32
    return %c0_i32, %c0_i32_0 : i32, i32
  }
  func.func @transform_6(%arg0: i32) -> (i32, i32) {
    %c0_i32 = arith.constant 0 : i32
    %c0_i32_0 = arith.constant 0 : i32
    %c0_i32_1 = arith.constant 0 : i32
    return %c0_i32, %c0_i32_0 : i32, i32
  }
  func.func @transform_7(%arg0: i32) -> (i32, i32) {
    %c0_i32 = arith.constant 0 : i32
    %c0_i32_0 = arith.constant 0 : i32
    %c0_i32_1 = arith.constant 0 : i32
    return %c0_i32, %c0_i32_0 : i32, i32
  }
  func.func @transform_8(%arg0: i32) -> (i32, i32) {
    %c0_i32 = arith.constant 0 : i32
    %c0_i32_0 = arith.constant 0 : i32
    %c0_i32_1 = arith.constant 0 : i32
    return %c0_i32, %c0_i32_0 : i32, i32
  }
  func.func @transform_9(%arg0: i32) -> (i32, i32) {
    %c0_i32 = arith.constant 0 : i32
    %c0_i32_0 = arith.constant 0 : i32
    %c0_i32_1 = arith.constant 0 : i32
    return %c0_i32, %c0_i32_0 : i32, i32
  }
  func.func @transform_10(%arg0: i32) -> (i32, i32) {
    %c0_i32 = arith.constant 0 : i32
    %c0_i32_0 = arith.constant 0 : i32
    %c0_i32_1 = arith.constant 0 : i32
    return %c0_i32, %c0_i32_0 : i32, i32
  }
  func.func @transform_11(%arg0: i32) -> (i32, i32) {
    %c0_i32 = arith.constant 0 : i32
    %c0_i32_0 = arith.constant 0 : i32
    %c0_i32_1 = arith.constant 0 : i32
    return %c0_i32, %c0_i32_0 : i32, i32
  }
  func.func @transform_12(%arg0: i32) -> (i32, i32) {
    %c0_i32 = arith.constant 0 : i32
    %c0_i32_0 = arith.constant 0 : i32
    %c0_i32_1 = arith.constant 0 : i32
    return %c0_i32, %c0_i32_0 : i32, i32
  }
  func.func @transform_13(%arg0: i32) -> (i32, i32) {
    %c0_i32 = arith.constant 0 : i32
    %c0_i32_0 = arith.constant 0 : i32
    %c0_i32_1 = arith.constant 0 : i32
    return %c0_i32, %c0_i32_0 : i32, i32
  }
  func.func @transform_14(%arg0: i32) -> (i32, i32) {
    %c0_i32 = arith.constant 0 : i32
    %c0_i32_0 = arith.constant 0 : i32
    %c0_i32_1 = arith.constant 0 : i32
    return %c0_i32, %c0_i32_0 : i32, i32
  }
  func.func @transform_15(%arg0: i32) -> (i32, i32) {
    %c0_i32 = arith.constant 0 : i32
    %c0_i32_0 = arith.constant 0 : i32
    %c0_i32_1 = arith.constant 0 : i32
    return %c0_i32, %c0_i32_0 : i32, i32
  }
  func.func @transform_16(%arg0: i32) -> (i32, i32) {
    %c0_i32 = arith.constant 0 : i32
    %c0_i32_0 = arith.constant 0 : i32
    %c0_i32_1 = arith.constant 0 : i32
    return %c0_i32, %c0_i32_0 : i32, i32
  }
  func.func @transform_17(%arg0: i32) -> (i32, i32) {
    %c0_i32 = arith.constant 0 : i32
    %c0_i32_0 = arith.constant 0 : i32
    %c0_i32_1 = arith.constant 0 : i32
    return %c0_i32, %c0_i32_0 : i32, i32
  }
  func.func @transform_18(%arg0: i32) -> (i32, i32, i32) {
    %c0_i32 = arith.constant 0 : i32
    %c0_i32_0 = arith.constant 0 : i32
    %c0_i32_1 = arith.constant 0 : i32
    return %arg0, %c0_i32, %c0_i32_0 : i32, i32, i32
  }
}

</mosaic_0001>

<llo_original>
// kernel: tpu_custom_call.1
$region0: #{tpu_custom_call.1}
  #allocation0 [shape = 'u32[]', space=smem, size = 0x4, offset = 0x4, fixed_abs, tag = 'smem constant byte address 0x4 - core index']
  #allocation1 [shape = 'u32[144,128]{1,0:T(1,128)}', space=vmem, size = 0x12000, scoped, tag = 'internal scratch']
  %s0 = inlined_call_operand.vmem [shape: f32[2,8,32], index: 0, kind: input, shape index: {}]
  %s1 = inlined_call_operand.vmem [shape: f32[1,32], index: 1, kind: input, shape index: {}]
  %s2 = inlined_call_operand.hbm [shape: f32[1,32], index: 2, kind: input, shape index: {}]
  %s3 = inlined_call_operand.hbm [shape: f32[1,32], index: 3, kind: input, shape index: {}]
  %s4 = inlined_call_operand.hbm [shape: f32[1,32], index: 4, kind: input, shape index: {}]
  %s5 = inlined_call_operand.hbm [shape: f32[1,32], index: 5, kind: input, shape index: {}]
  %s6 = inlined_call_operand.hbm [shape: f32[1,32], index: 6, kind: input, shape index: {}]
  %s7 = inlined_call_operand.vmem [shape: bf16[32,32], index: 7, kind: input, shape index: {}]
  %s8 = inlined_call_operand.vmem [shape: bf16[32,32], index: 8, kind: input, shape index: {}]
  %s9 = inlined_call_operand.vmem [shape: bf16[32,32], index: 9, kind: input, shape index: {}]
  %s10 = inlined_call_operand.vmem [shape: bf16[32,32], index: 10, kind: input, shape index: {}]
  %s11 = inlined_call_operand.hbm [shape: f32[1,32], index: 11, kind: input, shape index: {}]
  %s12 = inlined_call_operand.hbm [shape: f32[1,32], index: 12, kind: input, shape index: {}]
  %s13 = inlined_call_operand.hbm [shape: f32[1,32], index: 13, kind: input, shape index: {}]
  %s14 = inlined_call_operand.vmem [shape: f32[1,32], index: 14, kind: input, shape index: {}]
  %s15 = inlined_call_operand.vmem [shape: bf16[32,128], index: 15, kind: input, shape index: {}]
  %s16 = inlined_call_operand.vmem [shape: bf16[128,32], index: 16, kind: input, shape index: {}]
  %s17 = inlined_call_operand.vmem [shape: bf16[32,32], index: 17, kind: input, shape index: {}]
  %s18 = inlined_call_operand.hbm [shape: f32[2,8,32], index: 18, kind: output, shape index: {}]
  %s19 = sld [smem:[#allocation0]]
  $region137: #{tpu_custom_call.1} parent=0
    _
  %s21 = ssub.s32 1, %s19
  %s22 = scalar_select 0, %s21, %s19
  $region1: #{tpu_custom_call.1} parent=0
    #allocation2 [shape = 'u8[512]{0}', space=vmem, size = 0x400, scoped, tag = 'input window, operand 2, single buffered']
    #allocation3 [shape = 's32[2]{0}', space=sflag, size = 0x8, scoped, tag = 'scoped memory for tpu_custom_call.1']
    #allocation4 [shape = 's32[2]{0}', space=sflag, size = 0x8, scoped, tag = 'scoped memory for tpu_custom_call.1']
    #allocation5 [shape = 'u8[512]{0}', space=vmem, size = 0x400, scoped, tag = 'input window, operand 3, single buffered']
    #allocation6 [shape = 's32[1]{0}', space=sflag, size = 0x4, scoped, tag = 'scoped memory for tpu_custom_call.1']
    #allocation7 [shape = 'u8[512]{0}', space=vmem, size = 0x400, scoped, tag = 'input window, operand 4, single buffered']
    #allocation8 [shape = 'u8[512]{0}', space=vmem, size = 0x400, scoped, tag = 'input window, operand 5, single buffered']
    #allocation9 [shape = 's32[1]{0}', space=sflag, size = 0x4, scoped, tag = 'scoped memory for tpu_custom_call.1']
    #allocation10 [shape = 'u8[512]{0}', space=vmem, size = 0x400, scoped, tag = 'input window, operand 6, single buffered']
    #allocation11 [shape = 'u8[512]{0}', space=vmem, size = 0x400, scoped, tag = 'input window, operand 11, single buffered']
    #allocation12 [shape = 's32[1]{0}', space=sflag, size = 0x4, scoped, tag = 'scoped memory for tpu_custom_call.1']
    #allocation13 [shape = 'u8[512]{0}', space=vmem, size = 0x400, scoped, tag = 'input window, operand 12, single buffered']
    #allocation14 [shape = 'u8[512]{0}', space=vmem, size = 0x400, scoped, tag = 'input window, operand 13, single buffered']
    #allocation15 [shape = 's32[1]{0}', space=sflag, size = 0x4, scoped, tag = 'scoped memory for tpu_custom_call.1']
    #allocation16 [shape = 'u8[8192]{0}', space=vmem, size = 0x2000, scoped, tag = 'output window, operand 0']
    %23 = vsyncpa [#allocation3], 0
    %24 = vsyncpa [#allocation6], 0
    %25 = vsyncpa [#allocation9], 0
    %26 = vsyncpa [#allocation12], 0
    %27 = vsyncpa [#allocation15], 0
    %28 = vsyncpa [#allocation4], 0
    %s29 = scalar_lea.sflag [#allocation4], 1
    %30 = vsyncpa %s29, 0
    loop: start=0, step=1, limit=4
    $region2: #{tpu_custom_call.1} parent=1 // loop_pre_header
      _
    $region3: #{tpu_custom_call.1} parent=1 // loop_header
      %s32 = sphi 0, %s36
      %p33 = scmp.ge.s32.totalorder %s32, 4
      %s42 = sphi 0, %s44
      %s45 = sphi 0, %s42
      %s46 = sphi 0, %s45
      %s62 = sphi 0, %s46
      %s66 = sphi 0, %s66
      %s68 = sphi 0, %s66
      %s69 = sphi 0, %s68
      %s83 = sphi 0, %s69
      %s87 = sphi 0, %s87
      %s89 = sphi 0, %s87
      %s90 = sphi 0, %s89
      %s104 = sphi 0, %s90
      %s108 = sphi 0, %s108
      %s110 = sphi 0, %s108
      %s111 = sphi 0, %s110
      %s125 = sphi 0, %s111
      %s129 = sphi 0, %s129
      %s131 = sphi 0, %s129
      %s132 = sphi 0, %s131
      %s146 = sphi 0, %s132
      %s150 = sphi 0, %s150
      %s152 = sphi 0, %s150
      %s153 = sphi 0, %s152
      %s167 = sphi 0, %s153
      %s171 = sphi 0, %s171
      %s173 = sphi 0, %s171
      %s174 = sphi 0, %s173
      %s188 = sphi 0, %s174
      %s192 = sphi 0, %s192
      %s194 = sphi 0, %s192
      %s195 = sphi 0, %s194
      %s209 = sphi 0, %s195
      %s213 = sphi 0, %s213
      %s215 = sphi 0, %s213
      %s216 = sphi 0, %s215
      %s230 = sphi 0, %s216
      %s234 = sphi 0, %s234
      %s236 = sphi 0, %s234
      %s237 = sphi 0, %s236
      %s251 = sphi 0, %s237
      %s255 = sphi 0, %s255
      %s257 = sphi 0, %s255
      %s258 = sphi 0, %s257
      %s272 = sphi 0, %s258
      %s276 = sphi 0, %s276
      %s278 = sphi 0, %s276
      %s279 = sphi 0, %s278
      %s293 = sphi 0, %s279
      %s297 = sphi 0, %s297
      %s299 = sphi 0, %s297
      %s300 = sphi 0, %s299
      %s314 = sphi 0, %s300
      %s318 = sphi 0, %s318
      %s320 = sphi 0, %s318
      %s321 = sphi 0, %s320
      %s335 = sphi 0, %s321
      %s339 = sphi 0, %s339
      %s341 = sphi 0, %s339
      %s342 = sphi 0, %s341
      %s356 = sphi 0, %s342
      %s360 = sphi 0, %s360
      %s362 = sphi 0, %s360
      %s363 = sphi 0, %s362
      %s377 = sphi 0, %s363
      %s381 = sphi 0, %s381
      %s383 = sphi 0, %s381
      %s384 = sphi 0, %s383
      %s398 = sphi 0, %s384
      %s402 = sphi 0, %s402
      %s404 = sphi 0, %s402
      %s405 = sphi 0, %s404
      %s419 = sphi 0, %s405
      %s425 = sphi 0, %s427
      %s428 = sphi 0, %s425
      %s429 = sphi 0, %s428
      %s445 = sphi 0, %s429
    $region4: #{tpu_custom_call.1} parent=1 // loop_header_branch
      %35 = sbr.rel (%p33) target = $region8
    $region5: #{tpu_custom_call.1} parent=1 // loop_body
      %s37 = ssub.s32 %s32, 1
      %s38 = ssub.s32 %s32, 2
      %s39 = sadd.s32 %s32, 1
      %s40 = ssub.s32 %s32, %s39
      %p41 = scmp.eq.s32.totalorder %s40, 0
      %s43 = sadd.s32 %s42, 1
      %s44 = scalar_select %p41, %s42, %s43
      %p47 = pneg %p41
      %p48 = scmp.eq.s32.totalorder %s32, 1
      %p49 = por %p47, %p48
      %p50 = scmp.ne.s32.totalorder %s42, %s45
      %p51 = scmp.eq.s32.totalorder %s32, 0
      %p52 = por %p50, %p51
      %p53 = scmp.ne.s32.totalorder %s42, %s45
      %p54 = scmp.eq.s32.totalorder %s37, 1
      %p55 = por %p53, %p54
      %p56 = scmp.ne.s32.totalorder %s45, %s46
      %p57 = scmp.eq.s32.totalorder %s37, 0
      %p58 = por %p56, %p57
      %p59 = scmp.ne.s32.totalorder %s45, %s46
      %p60 = scmp.eq.s32.totalorder %s38, 1
      %p61 = por %p59, %p60
      %p63 = scmp.ne.s32.totalorder %s46, %s62
      %p64 = scmp.eq.s32.totalorder %s38, 0
      %p65 = por %p63, %p64
      %s67 = sadd.s32 %s66, 1
      %p70 = scmp.eq.s32.totalorder %s32, 1
      %p71 = scmp.ne.s32.totalorder %s66, %s68
      %p72 = scmp.eq.s32.totalorder %s32, 0
      %p73 = por %p71, %p72
      %p74 = scmp.ne.s32.totalorder %s66, %s68
      %p75 = scmp.eq.s32.totalorder %s37, 1
      %p76 = por %p74, %p75
      %p77 = scmp.ne.s32.totalorder %s68, %s69
      %p78 = scmp.eq.s32.totalorder %s37, 0
      %p79 = por %p77, %p78
      %p80 = scmp.ne.s32.totalorder %s68, %s69
      %p81 = scmp.eq.s32.totalorder %s38, 1
      %p82 = por %p80, %p81
      %p84 = scmp.ne.s32.totalorder %s69, %s83
      %p85 = scmp.eq.s32.totalorder %s38, 0
      %p86 = por %p84, %p85
      %s88 = sadd.s32 %s87, 1
      %p91 = scmp.eq.s32.totalorder %s32, 1
      %p92 = scmp.ne.s32.totalorder %s87, %s89
      %p93 = scmp.eq.s32.totalorder %s32, 0
      %p94 = por %p92, %p93
      %p95 = scmp.ne.s32.totalorder %s87, %s89
      %p96 = scmp.eq.s32.totalorder %s37, 1
      %p97 = por %p95, %p96
      %p98 = scmp.ne.s32.totalorder %s89, %s90
      %p99 = scmp.eq.s32.totalorder %s37, 0
      %p100 = por %p98, %p99
      %p101 = scmp.ne.s32.totalorder %s89, %s90
      %p102 = scmp.eq.s32.totalorder %s38, 1
      %p103 = por %p101, %p102
      %p105 = scmp.ne.s32.totalorder %s90, %s104
      %p106 = scmp.eq.s32.totalorder %s38, 0
      %p107 = por %p105, %p106
      %s109 = sadd.s32 %s108, 1
      %p112 = scmp.eq.s32.totalorder %s32, 1
      %p113 = scmp.ne.s32.totalorder %s108, %s110
      %p114 = scmp.eq.s32.totalorder %s32, 0
      %p115 = por %p113, %p114
      %p116 = scmp.ne.s32.totalorder %s108, %s110
      %p117 = scmp.eq.s32.totalorder %s37, 1
      %p118 = por %p116, %p117
      %p119 = scmp.ne.s32.totalorder %s110, %s111
      %p120 = scmp.eq.s32.totalorder %s37, 0
      %p121 = por %p119, %p120
      %p122 = scmp.ne.s32.totalorder %s110, %s111
      %p123 = scmp.eq.s32.totalorder %s38, 1
      %p124 = por %p122, %p123
      %p126 = scmp.ne.s32.totalorder %s111, %s125
      %p127 = scmp.eq.s32.totalorder %s38, 0
      %p128 = por %p126, %p127
      %s130 = sadd.s32 %s129, 1
      %p133 = scmp.eq.s32.totalorder %s32, 1
      %p134 = scmp.ne.s32.totalorder %s129, %s131
      %p135 = scmp.eq.s32.totalorder %s32, 0
      %p136 = por %p134, %p135
      %p137 = scmp.ne.s32.totalorder %s129, %s131
      %p138 = scmp.eq.s32.totalorder %s37, 1
      %p139 = por %p137, %p138
      %p140 = scmp.ne.s32.totalorder %s131, %s132
      %p141 = scmp.eq.s32.totalorder %s37, 0
      %p142 = por %p140, %p141
      %p143 = scmp.ne.s32.totalorder %s131, %s132
      %p144 = scmp.eq.s32.totalorder %s38, 1
      %p145 = por %p143, %p144
      %p147 = scmp.ne.s32.totalorder %s132, %s146
      %p148 = scmp.eq.s32.totalorder %s38, 0
      %p149 = por %p147, %p148
      %s151 = sadd.s32 %s150, 1
      %p154 = scmp.eq.s32.totalorder %s32, 1
      %p155 = scmp.ne.s32.totalorder %s150, %s152
      %p156 = scmp.eq.s32.totalorder %s32, 0
      %p157 = por %p155, %p156
      %p158 = scmp.ne.s32.totalorder %s150, %s152
      %p159 = scmp.eq.s32.totalorder %s37, 1
      %p160 = por %p158, %p159
      %p161 = scmp.ne.s32.totalorder %s152, %s153
      %p162 = scmp.eq.s32.totalorder %s37, 0
      %p163 = por %p161, %p162
      %p164 = scmp.ne.s32.totalorder %s152, %s153
      %p165 = scmp.eq.s32.totalorder %s38, 1
      %p166 = por %p164, %p165
      %p168 = scmp.ne.s32.totalorder %s153, %s167
      %p169 = scmp.eq.s32.totalorder %s38, 0
      %p170 = por %p168, %p169
      %s172 = sadd.s32 %s171, 1
      %p175 = scmp.eq.s32.totalorder %s32, 1
      %p176 = scmp.ne.s32.totalorder %s171, %s173
      %p177 = scmp.eq.s32.totalorder %s32, 0
      %p178 = por %p176, %p177
      %p179 = scmp.ne.s32.totalorder %s171, %s173
      %p180 = scmp.eq.s32.totalorder %s37, 1
      %p181 = por %p179, %p180
      %p182 = scmp.ne.s32.totalorder %s173, %s174
      %p183 = scmp.eq.s32.totalorder %s37, 0
      %p184 = por %p182, %p183
      %p185 = scmp.ne.s32.totalorder %s173, %s174
      %p186 = scmp.eq.s32.totalorder %s38, 1
      %p187 = por %p185, %p186
      %p189 = scmp.ne.s32.totalorder %s174, %s188
      %p190 = scmp.eq.s32.totalorder %s38, 0
      %p191 = por %p189, %p190
      %s193 = sadd.s32 %s192, 1
      %p196 = scmp.eq.s32.totalorder %s32, 1
      %p197 = scmp.ne.s32.totalorder %s192, %s194
      %p198 = scmp.eq.s32.totalorder %s32, 0
      %p199 = por %p197, %p198
      %p200 = scmp.ne.s32.totalorder %s192, %s194
      %p201 = scmp.eq.s32.totalorder %s37, 1
      %p202 = por %p200, %p201
      %p203 = scmp.ne.s32.totalorder %s194, %s195
      %p204 = scmp.eq.s32.totalorder %s37, 0
      %p205 = por %p203, %p204
      %p206 = scmp.ne.s32.totalorder %s194, %s195
      %p207 = scmp.eq.s32.totalorder %s38, 1
      %p208 = por %p206, %p207
      %p210 = scmp.ne.s32.totalorder %s195, %s209
      %p211 = scmp.eq.s32.totalorder %s38, 0
      %p212 = por %p210, %p211
      %s214 = sadd.s32 %s213, 1
      %p217 = scmp.eq.s32.totalorder %s32, 1
      %p218 = scmp.ne.s32.totalorder %s213, %s215
      %p219 = scmp.eq.s32.totalorder %s32, 0
      %p220 = por %p218, %p219
      %p221 = scmp.ne.s32.totalorder %s213, %s215
      %p222 = scmp.eq.s32.totalorder %s37, 1
      %p223 = por %p221, %p222
      %p224 = scmp.ne.s32.totalorder %s215, %s216
      %p225 = scmp.eq.s32.totalorder %s37, 0
      %p226 = por %p224, %p225
      %p227 = scmp.ne.s32.totalorder %s215, %s216
      %p228 = scmp.eq.s32.totalorder %s38, 1
      %p229 = por %p227, %p228
      %p231 = scmp.ne.s32.totalorder %s216, %s230
      %p232 = scmp.eq.s32.totalorder %s38, 0
      %p233 = por %p231, %p232
      %s235 = sadd.s32 %s234, 1
      %p238 = scmp.eq.s32.totalorder %s32, 1
      %p239 = scmp.ne.s32.totalorder %s234, %s236
      %p240 = scmp.eq.s32.totalorder %s32, 0
      %p241 = por %p239, %p240
      %p242 = scmp.ne.s32.totalorder %s234, %s236
      %p243 = scmp.eq.s32.totalorder %s37, 1
      %p244 = por %p242, %p243
      %p245 = scmp.ne.s32.totalorder %s236, %s237
      %p246 = scmp.eq.s32.totalorder %s37, 0
      %p247 = por %p245, %p246
      %p248 = scmp.ne.s32.totalorder %s236, %s237
      %p249 = scmp.eq.s32.totalorder %s38, 1
      %p250 = por %p248, %p249
      %p252 = scmp.ne.s32.totalorder %s237, %s251
      %p253 = scmp.eq.s32.totalorder %s38, 0
      %p254 = por %p252, %p253
      %s256 = sadd.s32 %s255, 1
      %p259 = scmp.eq.s32.totalorder %s32, 1
      %p260 = scmp.ne.s32.totalorder %s255, %s257
      %p261 = scmp.eq.s32.totalorder %s32, 0
      %p262 = por %p260, %p261
      %p263 = scmp.ne.s32.totalorder %s255, %s257
      %p264 = scmp.eq.s32.totalorder %s37, 1
      %p265 = por %p263, %p264
      %p266 = scmp.ne.s32.totalorder %s257, %s258
      %p267 = scmp.eq.s32.totalorder %s37, 0
      %p268 = por %p266, %p267
      %p269 = scmp.ne.s32.totalorder %s257, %s258
      %p270 = scmp.eq.s32.totalorder %s38, 1
      %p271 = por %p269, %p270
      %p273 = scmp.ne.s32.totalorder %s258, %s272
      %p274 = scmp.eq.s32.totalorder %s38, 0
      %p275 = por %p273, %p274
      %s277 = sadd.s32 %s276, 1
      %p280 = scmp.eq.s32.totalorder %s32, 1
      %p281 = scmp.ne.s32.totalorder %s276, %s278
      %p282 = scmp.eq.s32.totalorder %s32, 0
      %p283 = por %p281, %p282
      %p284 = scmp.ne.s32.totalorder %s276, %s278
      %p285 = scmp.eq.s32.totalorder %s37, 1
      %p286 = por %p284, %p285
      %p287 = scmp.ne.s32.totalorder %s278, %s279
      %p288 = scmp.eq.s32.totalorder %s37, 0
      %p289 = por %p287, %p288
      %p290 = scmp.ne.s32.totalorder %s278, %s279
      %p291 = scmp.eq.s32.totalorder %s38, 1
      %p292 = por %p290, %p291
      %p294 = scmp.ne.s32.totalorder %s279, %s293
      %p295 = scmp.eq.s32.totalorder %s38, 0
      %p296 = por %p294, %p295
      %s298 = sadd.s32 %s297, 1
      %p301 = scmp.eq.s32.totalorder %s32, 1
      %p302 = scmp.ne.s32.totalorder %s297, %s299
      %p303 = scmp.eq.s32.totalorder %s32, 0
      %p304 = por %p302, %p303
      %p305 = scmp.ne.s32.totalorder %s297, %s299
      %p306 = scmp.eq.s32.totalorder %s37, 1
      %p307 = por %p305, %p306
      %p308 = scmp.ne.s32.totalorder %s299, %s300
      %p309 = scmp.eq.s32.totalorder %s37, 0
      %p310 = por %p308, %p309
      %p311 = scmp.ne.s32.totalorder %s299, %s300
      %p312 = scmp.eq.s32.totalorder %s38, 1
      %p313 = por %p311, %p312
      %p315 = scmp.ne.s32.totalorder %s300, %s314
      %p316 = scmp.eq.s32.totalorder %s38, 0
      %p317 = por %p315, %p316
      %s319 = sadd.s32 %s318, 1
      %p322 = scmp.eq.s32.totalorder %s32, 1
      %p323 = scmp.ne.s32.totalorder %s318, %s320
      %p324 = scmp.eq.s32.totalorder %s32, 0
      %p325 = por %p323, %p324
      %p326 = scmp.ne.s32.totalorder %s318, %s320
      %p327 = scmp.eq.s32.totalorder %s37, 1
      %p328 = por %p326, %p327
      %p329 = scmp.ne.s32.totalorder %s320, %s321
      %p330 = scmp.eq.s32.totalorder %s37, 0
      %p331 = por %p329, %p330
      %p332 = scmp.ne.s32.totalorder %s320, %s321
      %p333 = scmp.eq.s32.totalorder %s38, 1
      %p334 = por %p332, %p333
      %p336 = scmp.ne.s32.totalorder %s321, %s335
      %p337 = scmp.eq.s32.totalorder %s38, 0
      %p338 = por %p336, %p337
      %s340 = sadd.s32 %s339, 1
      %p343 = scmp.eq.s32.totalorder %s32, 1
      %p344 = scmp.ne.s32.totalorder %s339, %s341
      %p345 = scmp.eq.s32.totalorder %s32, 0
      %p346 = por %p344, %p345
      %p347 = scmp.ne.s32.totalorder %s339, %s341
      %p348 = scmp.eq.s32.totalorder %s37, 1
      %p349 = por %p347, %p348
      %p350 = scmp.ne.s32.totalorder %s341, %s342
      %p351 = scmp.eq.s32.totalorder %s37, 0
      %p352 = por %p350, %p351
      %p353 = scmp.ne.s32.totalorder %s341, %s342
      %p354 = scmp.eq.s32.totalorder %s38, 1
      %p355 = por %p353, %p354
      %p357 = scmp.ne.s32.totalorder %s342, %s356
      %p358 = scmp.eq.s32.totalorder %s38, 0
      %p359 = por %p357, %p358
      %s361 = sadd.s32 %s360, 1
      %p364 = scmp.eq.s32.totalorder %s32, 1
      %p365 = scmp.ne.s32.totalorder %s360, %s362
      %p366 = scmp.eq.s32.totalorder %s32, 0
      %p367 = por %p365, %p366
      %p368 = scmp.ne.s32.totalorder %s360, %s362
      %p369 = scmp.eq.s32.totalorder %s37, 1
      %p370 = por %p368, %p369
      %p371 = scmp.ne.s32.totalorder %s362, %s363
      %p372 = scmp.eq.s32.totalorder %s37, 0
      %p373 = por %p371, %p372
      %p374 = scmp.ne.s32.totalorder %s362, %s363
      %p375 = scmp.eq.s32.totalorder %s38, 1
      %p376 = por %p374, %p375
      %p378 = scmp.ne.s32.totalorder %s363, %s377
      %p379 = scmp.eq.s32.totalorder %s38, 0
      %p380 = por %p378, %p379
      %s382 = sadd.s32 %s381, 1
      %p385 = scmp.eq.s32.totalorder %s32, 1
      %p386 = scmp.ne.s32.totalorder %s381, %s383
      %p387 = scmp.eq.s32.totalorder %s32, 0
      %p388 = por %p386, %p387
      %p389 = scmp.ne.s32.totalorder %s381, %s383
      %p390 = scmp.eq.s32.totalorder %s37, 1
      %p391 = por %p389, %p390
      %p392 = scmp.ne.s32.totalorder %s383, %s384
      %p393 = scmp.eq.s32.totalorder %s37, 0
      %p394 = por %p392, %p393
      %p395 = scmp.ne.s32.totalorder %s383, %s384
      %p396 = scmp.eq.s32.totalorder %s38, 1
      %p397 = por %p395, %p396
      %p399 = scmp.ne.s32.totalorder %s384, %s398
      %p400 = scmp.eq.s32.totalorder %s38, 0
      %p401 = por %p399, %p400
      %s403 = sadd.s32 %s402, 1
      %p406 = scmp.eq.s32.totalorder %s32, 1
      %p407 = scmp.ne.s32.totalorder %s402, %s404
      %p408 = scmp.eq.s32.totalorder %s32, 0
      %p409 = por %p407, %p408
      %p410 = scmp.ne.s32.totalorder %s402, %s404
      %p411 = scmp.eq.s32.totalorder %s37, 1
      %p412 = por %p410, %p411
      %p413 = scmp.ne.s32.totalorder %s404, %s405
      %p414 = scmp.eq.s32.totalorder %s37, 0
      %p415 = por %p413, %p414
      %p416 = scmp.ne.s32.totalorder %s404, %s405
      %p417 = scmp.eq.s32.totalorder %s38, 1
      %p418 = por %p416, %p417
      %p420 = scmp.ne.s32.totalorder %s405, %s419
      %p421 = scmp.eq.s32.totalorder %s38, 0
      %p422 = por %p420, %p421
      %s423 = ssub.s32 %s32, %s39
      %p424 = scmp.eq.s32.totalorder %s423, 0
      %s426 = sadd.s32 %s425, 1
      %s427 = scalar_select %p424, %s425, %s426
      %p430 = pneg %p424
      %p431 = scmp.eq.s32.totalorder %s32, 1
      %p432 = por %p430, %p431
      %p433 = scmp.ne.s32.totalorder %s425, %s428
      %p434 = scmp.eq.s32.totalorder %s32, 0
      %p435 = por %p433, %p434
      %p436 = scmp.ne.s32.totalorder %s425, %s428
      %p437 = scmp.eq.s32.totalorder %s37, 1
      %p438 = por %p436, %p437
      %p439 = scmp.ne.s32.totalorder %s428, %s429
      %p440 = scmp.eq.s32.totalorder %s37, 0
      %p441 = por %p439, %p440
      %p442 = scmp.ne.s32.totalorder %s428, %s429
      %p443 = scmp.eq.s32.totalorder %s38, 1
      %p444 = por %p442, %p443
      %p446 = scmp.ne.s32.totalorder %s429, %s445
      %p447 = scmp.eq.s32.totalorder %s38, 0
      %p448 = por %p446, %p447
      %p449 = scmp.le.s32.totalorder 1, %s32
      %p450 = scmp.lt.s32.totalorder %s32, 3
      %p451 = pnand %p449, %p450
      %p452 = pneg %p451
      // Predicated region
      $region9: #{tpu_custom_call.1} parent=5 // pred_check
        _
      $region10: #{tpu_custom_call.1} parent=5 // pred_check_branch
        %454 = sbr.rel (%p451) target = $region12
      $region11: #{tpu_custom_call.1} parent=5 // pred_region
        %s455 = ssub.s32 %s32, 1
        // Predicated region
        $region13: #{tpu_custom_call.1} parent=11 // pred_check
          %p456 = pneg %p79
        $region14: #{tpu_custom_call.1} parent=11 // pred_check_branch
          %458 = sbr.rel (%p456) target = $region16
        $region15: #{tpu_custom_call.1} parent=11 // pred_region
          _
        $region16: #{tpu_custom_call.1} parent=11 // pred_fallthru
          _
        // Predicated region
        $region17: #{tpu_custom_call.1} parent=11 // pred_check
          %p459 = pneg %p100
        $region18: #{tpu_custom_call.1} parent=11 // pred_check_branch
          %461 = sbr.rel (%p459) target = $region20
        $region19: #{tpu_custom_call.1} parent=11 // pred_region
          %s463 = ssub.s32 16, 16
          %464 = vsyncadd [#allocation3], %s463
          %s466 = sshll.u32 [#allocation2], 4
          %s467 = int_to_ptr.vmem [resolvable:$true] %s466
          %469 = dma.hbm_to_vmem [thread:$0]  %s2, 16, %s467, [#allocation3]
        $region20: #{tpu_custom_call.1} parent=11 // pred_fallthru
          _
        // Predicated region
        $region21: #{tpu_custom_call.1} parent=11 // pred_check
          %p470 = pneg %p121
        $region22: #{tpu_custom_call.1} parent=11 // pred_check_branch
          %472 = sbr.rel (%p470) target = $region24
        $region23: #{tpu_custom_call.1} parent=11 // pred_region
          %s474 = ssub.s32 16, 16
          %475 = vsyncadd [#allocation6], %s474
          %s477 = sshll.u32 [#allocation5], 4
          %s478 = int_to_ptr.vmem [resolvable:$true] %s477
          %480 = dma.hbm_to_vmem [thread:$0]  %s3, 16, %s478, [#allocation6]
        $region24: #{tpu_custom_call.1} parent=11 // pred_fallthru
          _
        // Predicated region
        $region25: #{tpu_custom_call.1} parent=11 // pred_check
          %p481 = pneg %p142
        $region26: #{tpu_custom_call.1} parent=11 // pred_check_branch
          %483 = sbr.rel (%p481) target = $region28
        $region27: #{tpu_custom_call.1} parent=11 // pred_region
          %s485 = ssub.s32 16, 16
          %486 = vsyncadd [#allocation6], %s485
          %s488 = sshll.u32 [#allocation7], 4
          %s489 = int_to_ptr.vmem [resolvable:$true] %s488
          %491 = dma.hbm_to_vmem [thread:$0]  %s4, 16, %s489, [#allocation6]
        $region28: #{tpu_custom_call.1} parent=11 // pred_fallthru
          _
        // Predicated region
        $region29: #{tpu_custom_call.1} parent=11 // pred_check
          %p492 = pneg %p163
        $region30: #{tpu_custom_call.1} parent=11 // pred_check_branch
          %494 = sbr.rel (%p492) target = $region32
        $region31: #{tpu_custom_call.1} parent=11 // pred_region
          %s496 = ssub.s32 16, 16
          %497 = vsyncadd [#allocation9], %s496
          %s499 = sshll.u32 [#allocation8], 4
          %s500 = int_to_ptr.vmem [resolvable:$true] %s499
          %502 = dma.hbm_to_vmem [thread:$0]  %s5, 16, %s500, [#allocation9]
        $region32: #{tpu_custom_call.1} parent=11 // pred_fallthru
          _
        // Predicated region
        $region33: #{tpu_custom_call.1} parent=11 // pred_check
          %p503 = pneg %p184
        $region34: #{tpu_custom_call.1} parent=11 // pred_check_branch
          %505 = sbr.rel (%p503) target = $region36
        $region35: #{tpu_custom_call.1} parent=11 // pred_region
          %s507 = ssub.s32 16, 16
          %508 = vsyncadd [#allocation9], %s507
          %s510 = sshll.u32 [#allocation10], 4
          %s511 = int_to_ptr.vmem [resolvable:$true] %s510
          %513 = dma.hbm_to_vmem [thread:$0]  %s6, 16, %s511, [#allocation9]
        $region36: #{tpu_custom_call.1} parent=11 // pred_fallthru
          _
        // Predicated region
        $region37: #{tpu_custom_call.1} parent=11 // pred_check
          %p514 = pneg %p205
        $region38: #{tpu_custom_call.1} parent=11 // pred_check_branch
          %516 = sbr.rel (%p514) target = $region40
        $region39: #{tpu_custom_call.1} parent=11 // pred_region
          _
        $region40: #{tpu_custom_call.1} parent=11 // pred_fallthru
          _
        // Predicated region
        $region41: #{tpu_custom_call.1} parent=11 // pred_check
          %p517 = pneg %p226
        $region42: #{tpu_custom_call.1} parent=11 // pred_check_branch
          %519 = sbr.rel (%p517) target = $region44
        $region43: #{tpu_custom_call.1} parent=11 // pred_region
          _
        $region44: #{tpu_custom_call.1} parent=11 // pred_fallthru
          _
        // Predicated region
        $region45: #{tpu_custom_call.1} parent=11 // pred_check
          %p520 = pneg %p247
        $region46: #{tpu_custom_call.1} parent=11 // pred_check_branch
          %522 = sbr.rel (%p520) target = $region48
        $region47: #{tpu_custom_call.1} parent=11 // pred_region
          _
        $region48: #{tpu_custom_call.1} parent=11 // pred_fallthru
          _
        // Predicated region
        $region49: #{tpu_custom_call.1} parent=11 // pred_check
          %p523 = pneg %p268
        $region50: #{tpu_custom_call.1} parent=11 // pred_check_branch
          %525 = sbr.rel (%p523) target = $region52
        $region51: #{tpu_custom_call.1} parent=11 // pred_region
          _
        $region52: #{tpu_custom_call.1} parent=11 // pred_fallthru
          _
        // Predicated region
        $region53: #{tpu_custom_call.1} parent=11 // pred_check
          %p526 = pneg %p289
        $region54: #{tpu_custom_call.1} parent=11 // pred_check_branch
          %528 = sbr.rel (%p526) target = $region56
        $region55: #{tpu_custom_call.1} parent=11 // pred_region
          %s530 = ssub.s32 16, 16
          %531 = vsyncadd [#allocation12], %s530
          %s533 = sshll.u32 [#allocation11], 4
          %s534 = int_to_ptr.vmem [resolvable:$true] %s533
          %536 = dma.hbm_to_vmem [thread:$0]  %s11, 16, %s534, [#allocation12]
        $region56: #{tpu_custom_call.1} parent=11 // pred_fallthru
          _
        // Predicated region
        $region57: #{tpu_custom_call.1} parent=11 // pred_check
          %p537 = pneg %p310
        $region58: #{tpu_custom_call.1} parent=11 // pred_check_branch
          %539 = sbr.rel (%p537) target = $region60
        $region59: #{tpu_custom_call.1} parent=11 // pred_region
          %s541 = ssub.s32 16, 16
          %542 = vsyncadd [#allocation12], %s541
          %s544 = sshll.u32 [#allocation13], 4
          %s545 = int_to_ptr.vmem [resolvable:$true] %s544
          %547 = dma.hbm_to_vmem [thread:$0]  %s12, 16, %s545, [#allocation12]
        $region60: #{tpu_custom_call.1} parent=11 // pred_fallthru
          _
        // Predicated region
        $region61: #{tpu_custom_call.1} parent=11 // pred_check
          %p548 = pneg %p331
        $region62: #{tpu_custom_call.1} parent=11 // pred_check_branch
          %550 = sbr.rel (%p548) target = $region64
        $region63: #{tpu_custom_call.1} parent=11 // pred_region
          %s552 = ssub.s32 16, 16
          %553 = vsyncadd [#allocation15], %s552
          %s555 = sshll.u32 [#allocation14], 4
          %s556 = int_to_ptr.vmem [resolvable:$true] %s555
          %558 = dma.hbm_to_vmem [thread:$0]  %s13, 16, %s556, [#allocation15]
        $region64: #{tpu_custom_call.1} parent=11 // pred_fallthru
          _
        // Predicated region
        $region65: #{tpu_custom_call.1} parent=11 // pred_check
          %p559 = pneg %p352
        $region66: #{tpu_custom_call.1} parent=11 // pred_check_branch
          %561 = sbr.rel (%p559) target = $region68
        $region67: #{tpu_custom_call.1} parent=11 // pred_region
          _
        $region68: #{tpu_custom_call.1} parent=11 // pred_fallthru
          _
        // Predicated region
        $region69: #{tpu_custom_call.1} parent=11 // pred_check
          %p562 = pneg %p373
        $region70: #{tpu_custom_call.1} parent=11 // pred_check_branch
          %564 = sbr.rel (%p562) target = $region72
        $region71: #{tpu_custom_call.1} parent=11 // pred_region
          _
        $region72: #{tpu_custom_call.1} parent=11 // pred_fallthru
          _
        // Predicated region
        $region73: #{tpu_custom_call.1} parent=11 // pred_check
          %p565 = pneg %p394
        $region74: #{tpu_custom_call.1} parent=11 // pred_check_branch
          %567 = sbr.rel (%p565) target = $region76
        $region75: #{tpu_custom_call.1} parent=11 // pred_region
          _
        $region76: #{tpu_custom_call.1} parent=11 // pred_fallthru
          _
        // Predicated region
        $region77: #{tpu_custom_call.1} parent=11 // pred_check
          %p568 = pneg %p415
        $region78: #{tpu_custom_call.1} parent=11 // pred_check_branch
          %570 = sbr.rel (%p568) target = $region80
        $region79: #{tpu_custom_call.1} parent=11 // pred_region
          _
        $region80: #{tpu_custom_call.1} parent=11 // pred_fallthru
          _
      $region12: #{tpu_custom_call.1} parent=5 // pred_fallthru
        _
      %p571 = scmp.lt.s32.totalorder %s32, 2
      // Predicated region
      $region81: #{tpu_custom_call.1} parent=5 // pred_check
        %p572 = pneg %p571
      $region82: #{tpu_custom_call.1} parent=5 // pred_check_branch
        %574 = sbr.rel (%p572) target = $region84
      $region83: #{tpu_custom_call.1} parent=5 // pred_region
        // Predicated region
        $region85: #{tpu_custom_call.1} parent=83 // pred_check
          %p575 = pneg %p52
        $region86: #{tpu_custom_call.1} parent=83 // pred_check_branch
          %577 = sbr.rel (%p575) target = $region88
        $region87: #{tpu_custom_call.1} parent=83 // pred_region
          %p578 = scmp.lt.s32.totalorder %s32, 1
          %s579 = scalar_select %p578, %s32, 1
          %s580 = smul.addr %s579, 8
          %s581 = scalar_lea.vmem %s0, %s580
        $region88: #{tpu_custom_call.1} parent=83 // pred_fallthru
          _
      $region84: #{tpu_custom_call.1} parent=5 // pred_fallthru
        _
      %p582 = scmp.le.s32.totalorder 1, %s32
      %p583 = scmp.lt.s32.totalorder %s32, 3
      %p584 = pnand %p582, %p583
      %p585 = pneg %p584
      // Predicated region
      $region89: #{tpu_custom_call.1} parent=5 // pred_check
        _
      $region90: #{tpu_custom_call.1} parent=5 // pred_check_branch
        %587 = sbr.rel (%p584) target = $region92
      $region91: #{tpu_custom_call.1} parent=5 // pred_region
        %s588 = ssub.s32 %s32, 1
        // Predicated region
        $region93: #{tpu_custom_call.1} parent=91 // pred_check
          %p589 = pneg %p100
        $region94: #{tpu_custom_call.1} parent=91 // pred_check_branch
          %591 = sbr.rel (%p589) target = $region96
        $region95: #{tpu_custom_call.1} parent=91 // pred_region
          %592 = dma.done [#allocation3], 16
        $region96: #{tpu_custom_call.1} parent=91 // pred_fallthru
          _
        // Predicated region
        $region97: #{tpu_custom_call.1} parent=91 // pred_check
          %p593 = pneg %p121
        $region98: #{tpu_custom_call.1} parent=91 // pred_check_branch
          %595 = sbr.rel (%p593) target = $region100
        $region99: #{tpu_custom_call.1} parent=91 // pred_region
          %596 = dma.done [#allocation6], 16
        $region100: #{tpu_custom_call.1} parent=91 // pred_fallthru
          _
        // Predicated region
        $region101: #{tpu_custom_call.1} parent=91 // pred_check
          %p597 = pneg %p142
        $region102: #{tpu_custom_call.1} parent=91 // pred_check_branch
          %599 = sbr.rel (%p597) target = $region104
        $region103: #{tpu_custom_call.1} parent=91 // pred_region
          %600 = dma.done [#allocation6], 16
        $region104: #{tpu_custom_call.1} parent=91 // pred_fallthru
          _
        // Predicated region
        $region105: #{tpu_custom_call.1} parent=91 // pred_check
          %p601 = pneg %p163
        $region106: #{tpu_custom_call.1} parent=91 // pred_check_branch
          %603 = sbr.rel (%p601) target = $region108
        $region107: #{tpu_custom_call.1} parent=91 // pred_region
          %604 = dma.done [#allocation9], 16
        $region108: #{tpu_custom_call.1} parent=91 // pred_fallthru
          _
        // Predicated region
        $region109: #{tpu_custom_call.1} parent=91 // pred_check
          %p605 = pneg %p184
        $region110: #{tpu_custom_call.1} parent=91 // pred_check_branch
          %607 = sbr.rel (%p605) target = $region112
        $region111: #{tpu_custom_call.1} parent=91 // pred_region
          %608 = dma.done [#allocation9], 16
        $region112: #{tpu_custom_call.1} parent=91 // pred_fallthru
          _
        // Predicated region
        $region113: #{tpu_custom_call.1} parent=91 // pred_check
          %p609 = pneg %p289
        $region114: #{tpu_custom_call.1} parent=91 // pred_check_branch
          %611 = sbr.rel (%p609) target = $region116
        $region115: #{tpu_custom_call.1} parent=91 // pred_region
          %612 = dma.done [#allocation12], 16
        $region116: #{tpu_custom_call.1} parent=91 // pred_fallthru
          _
        // Predicated region
        $region117: #{tpu_custom_call.1} parent=91 // pred_check
          %p613 = pneg %p310
        $region118: #{tpu_custom_call.1} parent=91 // pred_check_branch
          %615 = sbr.rel (%p613) target = $region120
        $region119: #{tpu_custom_call.1} parent=91 // pred_region
          %616 = dma.done [#allocation12], 16
        $region120: #{tpu_custom_call.1} parent=91 // pred_fallthru
          _
        // Predicated region
        $region121: #{tpu_custom_call.1} parent=91 // pred_check
          %p617 = pneg %p331
        $region122: #{tpu_custom_call.1} parent=91 // pred_check_branch
          %619 = sbr.rel (%p617) target = $region124
        $region123: #{tpu_custom_call.1} parent=91 // pred_region
          %620 = dma.done [#allocation15], 16
        $region124: #{tpu_custom_call.1} parent=91 // pred_fallthru
          _
        %p621 = scmp.lt.s32.totalorder %s37, 1
        %s622 = scalar_select %p621, %s37, 1
        %s623 = smul.addr %s622, 8
        %s624 = scalar_lea.vmem %s0, %s623
        %p625 = pneg %p58
        %p626 = pneg %p55
        %p627 = pneg %p79
        %p628 = pneg %p76
        %p629 = pneg %p100
        %p630 = pneg %p97
        %p631 = pneg %p121
        %p632 = pneg %p118
        %p633 = pneg %p142
        %p634 = pneg %p139
        %p635 = pneg %p163
        %p636 = pneg %p160
        %p637 = pneg %p184
        %p638 = pneg %p181
        %p639 = pneg %p205
        %p640 = pneg %p202
        %p641 = pneg %p226
        %p642 = pneg %p223
        %p643 = pneg %p247
        %p644 = pneg %p244
        %p645 = pneg %p268
        %p646 = pneg %p265
        %p647 = pneg %p289
        %p648 = pneg %p286
        %p649 = pneg %p310
        %p650 = pneg %p307
        %p651 = pneg %p331
        %p652 = pneg %p328
        %p653 = pneg %p352
        %p654 = pneg %p349
        %p655 = pneg %p373
        %p656 = pneg %p370
        %p657 = pneg %p394
        %p658 = pneg %p391
        %p659 = pneg %p415
        %p660 = pneg %p412
        %p661 = pneg %p441
        %p662 = pneg %p438
        %s663 = sand.u32 %s428, 1
        %s664 = scalar_lea.sflag [#allocation4], %s663
        %s665 = sand.u32 %s428, 1
        %s666 = smul.addr %s665, 8
        %s667 = scalar_lea.vmem [#allocation16], %s666
        %p668 = scmp.lt.s32.totalorder %s37, 1
        %s669 = scalar_select %p668, %s37, 1
        %s670 = smul.addr %s669, 8
        %s671 = scalar_lea.vmem %s0, %s670
        %v673 = vld [vmem:[%s671] sm:$0xff]
        %v674 = vlaneseq
        %v675 = vshrl.u32 %v674, 7
        %vm676 = vcmp.lt.s32.totalorder %v675, 0
        %v677 = vsub.s32 0, %v675
        %v678 = vsel %vm676, %v677, %v675
        %v679 = vshrl.u32 %v678, 3
        %v680 = vand.u32 %v678, 7
        %v681 = vsub.s32 0, %v680
        %v682 = vsel %vm676, %v681, %v680
        %vm683 = vcmp.ne.s32.totalorder %v682, 0
        %vm684 = vcmp.lt.s32.totalorder %v682, 0
        %vm685 = vmand %vm684, %vm683
        %v686 = vadd.s32 %v682, 8
        %v687 = vsel %vm685, %v686, %v682
        %vm688 = vcmp.ne.s32.totalorder %v687, 0
        %v689 = vld [vmem:[%s1] sm:$0x1]
        %v690 = vld [vmem:[#allocation2] sm:$0x1]
        %vm691 = vcmask 261120
        %v692 = vsel %vm691, %v673, 0.0
        %693 = vadd.xlane.f32.xlu0 %v692
        %v694 = vpop.xlane.xlu0 %693
        %v695 = vrcp.pop 32.0
        %v696 = vmul.f32 %v694, %v695
        %v697 = vsub.f32 %v673, %v696
        %v698 = vmul.f32 %v697, %v697
        %v699 = vsel %vm691, %v698, 0.0
        %700 = vadd.xlane.f32.xlu0 %v699
        %v701 = vpop.xlane.xlu0 %700
        %v702 = vmul.f32 %v701, %v695
        %v703 = vadd.f32 %v702, 1e-05
        %v704 = vrsqrt.pop %v703
        %v705 = vmul.f32 %v697, %v704
        %v707 = vlaneseq
        %v708 = vshrl.u32 %v707, 7
        %v709 = vsub.s32 0, %v708
        %v710 = vrot.slane %v689, %v709
        %v712 = vmul.f32 %v705, %v710
        %v714 = vlaneseq
        %v715 = vshrl.u32 %v714, 7
        %v716 = vsub.s32 0, %v715
        %v717 = vrot.slane %v690, %v716
        %v719 = vadd.f32 %v712, %v717
        %v720 = vrot.slane %v719, 7
        %v721 = vsel %vm688, %v720, 0.0
        %v722 = vsub.f32 %v719, %v721
        %v723 = vld [vmem:[#allocation5] sm:$0x1]
        %v725 = vlaneseq
        %v726 = vshrl.u32 %v725, 7
        %v727 = vsub.s32 0, %v726
        %v728 = vrot.slane %v723, %v727
        %v730 = vmul.f32 %v722, %v728
        %v731 = vadd.f32 %v721, %v730
        %v732 = vld [vmem:[#allocation7] sm:$0x1]
        %v734 = vlaneseq
        %v735 = vshrl.u32 %v734, 7
        %v736 = vsub.s32 0, %v735
        %v737 = vrot.slane %v732, %v736
        %v739 = vmul.f32 %v722, %v737
        %v740 = vadd.f32 %v721, %v739
        %v741 = vld [vmem:[#allocation8] sm:$0x1]
        %v743 = vlaneseq
        %v744 = vshrl.u32 %v743, 7
        %v745 = vsub.s32 0, %v744
        %v746 = vrot.slane %v741, %v745
        %v748 = vmul.f32 %v722, %v746
        %v749 = vadd.f32 %v721, %v748
        %v750 = vpack.c.bf16 %v731, %v731
        %v751 = vld [vmem:[%s7] sm:$0xf]
        %v752 = vld [vmem:[%s7 + $0x4] sm:$0xf]
        %v753 = vld [vmem:[%s7 + $0x8] sm:$0xf]
        %v754 = vld [vmem:[%s7 + $0xc] sm:$0xf]
        %v759 = vunpack.c.l.b16 %v751
        %v760 = vunpack.c.l.b16 %v752
        %v761 = vunpack.c.l.b16 %v753
        %v762 = vunpack.c.l.b16 %v754
        %v763 = vpack.c.b16 %v760, %v759
        %v764 = vpack.c.b16 %v762, %v761
        %v768 = vsel %vm691, %v750, 0
        %770 = vmatprep.subr.bf16.mxu0 0
        %771 = vmatpush1.bf16.msra.mxu0 %v763
        %772 = vmatprep.subr.bf16.mxu0 0
        %773 = vmatpush1.bf16.msra.mxu0 %v764
        %774 = vmatprep.subr.bf16.mxu0 0
        %775 = vmatpush1.bf16.msra.mxu0 0
        %776 = vmatprep.subr.bf16.mxu0 0
        %777 = vmatpush1.bf16.msra.mxu0 0
        %778 = vmatprep.subr.bf16.mxu0 0
        %779 = vmatpush1.bf16.msra.mxu0 0
        %780 = vmatprep.subr.bf16.mxu0 0
        %781 = vmatpush1.bf16.msra.mxu0 0
        %782 = vmatprep.subr.bf16.mxu0 0
        %783 = vmatpush1.bf16.msra.mxu0 0
        %784 = vmatprep.subr.bf16.mxu0 0
        %785 = vmatpush1.bf16.msra.mxu0 0
        %786 = vmatprep.subr.bf16.mxu0 0
        %787 = vmatpush1.bf16.msra.mxu0 0
        %788 = vmatprep.subr.bf16.mxu0 0
        %789 = vmatpush1.bf16.msra.mxu0 0
        %790 = vmatprep.subr.bf16.mxu0 0
        %791 = vmatpush1.bf16.msra.mxu0 0
        %792 = vmatprep.subr.bf16.mxu0 0
        %793 = vmatpush1.bf16.msra.mxu0 0
        %794 = vmatprep.subr.bf16.mxu0 0
        %795 = vmatpush1.bf16.msra.mxu0 0
        %796 = vmatprep.subr.bf16.mxu0 0
        %797 = vmatpush1.bf16.msra.mxu0 0
        %798 = vmatprep.subr.bf16.mxu0 0
        %799 = vmatpush1.bf16.msra.mxu0 0
        %800 = vmatprep.subr.bf16.mxu0 0
        %801 = vmatpush1.bf16.msra.mxu0 0
        %802 = vmatprep.mubr.bf16.mxu0 0
        %803 = vmatmul.mubr.bf16.gmra.mrb[0].mxu0 %v768
        %v804 = vpop.f32.mrb[0].mxu0
        %v805 = vadd.f32 0.0, %v804
        %v806 = vpop.f32.mrb[0].mxu0
        %v807 = vpop.f32.mrb[0].mxu0
        %v808 = vpop.f32.mrb[0].mxu0
        %809 = vdwg.mxu0
        %v810 = vpack.c.bf16 %v740, %v740
        %v811 = vld [vmem:[%s8] sm:$0xf]
        %v812 = vld [vmem:[%s8 + $0x4] sm:$0xf]
        %v813 = vld [vmem:[%s8 + $0x8] sm:$0xf]
        %v814 = vld [vmem:[%s8 + $0xc] sm:$0xf]
        %v819 = vunpack.c.l.b16 %v811
        %v820 = vunpack.c.l.b16 %v812
        %v821 = vunpack.c.l.b16 %v813
        %v822 = vunpack.c.l.b16 %v814
        %v823 = vpack.c.b16 %v820, %v819
        %v824 = vpack.c.b16 %v822, %v821
        %v828 = vsel %vm691, %v810, 0
        %830 = vmatprep.subr.bf16.mxu0 0
        %831 = vmatpush1.bf16.msra.mxu0 %v823
        %832 = vmatprep.subr.bf16.mxu0 0
        %833 = vmatpush1.bf16.msra.mxu0 %v824
        %834 = vmatprep.subr.bf16.mxu0 0
        %835 = vmatpush1.bf16.msra.mxu0 0
        %836 = vmatprep.subr.bf16.mxu0 0
        %837 = vmatpush1.bf16.msra.mxu0 0
        %838 = vmatprep.subr.bf16.mxu0 0
        %839 = vmatpush1.bf16.msra.mxu0 0
        %840 = vmatprep.subr.bf16.mxu0 0
        %841 = vmatpush1.bf16.msra.mxu0 0
        %842 = vmatprep.subr.bf16.mxu0 0
        %843 = vmatpush1.bf16.msra.mxu0 0
        %844 = vmatprep.subr.bf16.mxu0 0
        %845 = vmatpush1.bf16.msra.mxu0 0
        %846 = vmatprep.subr.bf16.mxu0 0
        %847 = vmatpush1.bf16.msra.mxu0 0
        %848 = vmatprep.subr.bf16.mxu0 0
        %849 = vmatpush1.bf16.msra.mxu0 0
        %850 = vmatprep.subr.bf16.mxu0 0
        %851 = vmatpush1.bf16.msra.mxu0 0
        %852 = vmatprep.subr.bf16.mxu0 0
        %853 = vmatpush1.bf16.msra.mxu0 0
        %854 = vmatprep.subr.bf16.mxu0 0
        %855 = vmatpush1.bf16.msra.mxu0 0
        %856 = vmatprep.subr.bf16.mxu0 0
        %857 = vmatpush1.bf16.msra.mxu0 0
        %858 = vmatprep.subr.bf16.mxu0 0
        %859 = vmatpush1.bf16.msra.mxu0 0
        %860 = vmatprep.subr.bf16.mxu0 0
        %861 = vmatpush1.bf16.msra.mxu0 0
        %862 = vmatprep.mubr.bf16.mxu0 0
        %863 = vmatmul.mubr.bf16.gmra.mrb[0].mxu0 %v828
        %v864 = vpop.f32.mrb[0].mxu0
        %v865 = vadd.f32 0.0, %v864
        %v866 = vpop.f32.mrb[0].mxu0
        %v867 = vpop.f32.mrb[0].mxu0
        %v868 = vpop.f32.mrb[0].mxu0
        %869 = vdwg.mxu0
        %v870 = vpack.c.bf16 %v749, %v749
        %v871 = vld [vmem:[%s9] sm:$0xf]
        %v872 = vld [vmem:[%s9 + $0x4] sm:$0xf]
        %v873 = vld [vmem:[%s9 + $0x8] sm:$0xf]
        %v874 = vld [vmem:[%s9 + $0xc] sm:$0xf]
        %v879 = vunpack.c.l.b16 %v871
        %v880 = vunpack.c.l.b16 %v872
        %v881 = vunpack.c.l.b16 %v873
        %v882 = vunpack.c.l.b16 %v874
        %v883 = vpack.c.b16 %v880, %v879
        %v884 = vpack.c.b16 %v882, %v881
        %v888 = vsel %vm691, %v870, 0
        %890 = vmatprep.subr.bf16.mxu0 0
        %891 = vmatpush1.bf16.msra.mxu0 %v883
        %892 = vmatprep.subr.bf16.mxu0 0
        %893 = vmatpush1.bf16.msra.mxu0 %v884
        %894 = vmatprep.subr.bf16.mxu0 0
        %895 = vmatpush1.bf16.msra.mxu0 0
        %896 = vmatprep.subr.bf16.mxu0 0
        %897 = vmatpush1.bf16.msra.mxu0 0
        %898 = vmatprep.subr.bf16.mxu0 0
        %899 = vmatpush1.bf16.msra.mxu0 0
        %900 = vmatprep.subr.bf16.mxu0 0
        %901 = vmatpush1.bf16.msra.mxu0 0
        %902 = vmatprep.subr.bf16.mxu0 0
        %903 = vmatpush1.bf16.msra.mxu0 0
        %904 = vmatprep.subr.bf16.mxu0 0
        %905 = vmatpush1.bf16.msra.mxu0 0
        %906 = vmatprep.subr.bf16.mxu0 0
        %907 = vmatpush1.bf16.msra.mxu0 0
        %908 = vmatprep.subr.bf16.mxu0 0
        %909 = vmatpush1.bf16.msra.mxu0 0
        %910 = vmatprep.subr.bf16.mxu0 0
        %911 = vmatpush1.bf16.msra.mxu0 0
        %912 = vmatprep.subr.bf16.mxu0 0
        %913 = vmatpush1.bf16.msra.mxu0 0
        %914 = vmatprep.subr.bf16.mxu0 0
        %915 = vmatpush1.bf16.msra.mxu0 0
        %916 = vmatprep.subr.bf16.mxu0 0
        %917 = vmatpush1.bf16.msra.mxu0 0
        %918 = vmatprep.subr.bf16.mxu0 0
        %919 = vmatpush1.bf16.msra.mxu0 0
        %920 = vmatprep.subr.bf16.mxu0 0
        %921 = vmatpush1.bf16.msra.mxu0 0
        %922 = vmatprep.mubr.bf16.mxu0 0
        %923 = vmatmul.mubr.bf16.gmra.mrb[0].mxu0 %v888
        %v924 = vpop.f32.mrb[0].mxu0
        %v925 = vadd.f32 0.0, %v924
        %v926 = vpop.f32.mrb[0].mxu0
        %v927 = vpop.f32.mrb[0].mxu0
        %v928 = vpop.f32.mrb[0].mxu0
        %929 = vdwg.mxu0
        %v930 = vld [vmem:[#allocation10] sm:$0x1]
        %v932 = vlaneseq
        %v933 = vshrl.u32 %v932, 7
        %v934 = vsub.s32 0, %v933
        %v935 = vrot.slane %v930, %v934
        %v937 = vmul.f32 %v805, %v935
        %v938 = vsub.f32 0.0, %v925
        %v939 = vmul.f32 %v938, 1.442695
        %v940 = vpow.pop %v939
        %v941 = vadd.f32 %v940, 1.0
        %v942 = vrcp.pop %v941
        %v943 = vmul.f32 %v937, %v865
        %v944 = vrcp.pop %v937
        %v945 = vmul.f32 %v943, %v944
        %v946 = vmul.f32 %v942, %v945
        %v947 = vpack.c.bf16 %v946, %v946
        %v948 = vld [vmem:[%s10] sm:$0xf]
        %v949 = vld [vmem:[%s10 + $0x4] sm:$0xf]
        %v950 = vld [vmem:[%s10 + $0x8] sm:$0xf]
        %v951 = vld [vmem:[%s10 + $0xc] sm:$0xf]
        %v956 = vunpack.c.l.b16 %v948
        %v957 = vunpack.c.l.b16 %v949
        %v958 = vunpack.c.l.b16 %v950
        %v959 = vunpack.c.l.b16 %v951
        %v960 = vpack.c.b16 %v957, %v956
        %v961 = vpack.c.b16 %v959, %v958
        %v965 = vsel %vm691, %v947, 0
        %967 = vmatprep.subr.bf16.mxu0 0
        %968 = vmatpush1.bf16.msra.mxu0 %v960
        %969 = vmatprep.subr.bf16.mxu0 0
        %970 = vmatpush1.bf16.msra.mxu0 %v961
        %971 = vmatprep.subr.bf16.mxu0 0
        %972 = vmatpush1.bf16.msra.mxu0 0
        %973 = vmatprep.subr.bf16.mxu0 0
        %974 = vmatpush1.bf16.msra.mxu0 0
        %975 = vmatprep.subr.bf16.mxu0 0
        %976 = vmatpush1.bf16.msra.mxu0 0
        %977 = vmatprep.subr.bf16.mxu0 0
        %978 = vmatpush1.bf16.msra.mxu0 0
        %979 = vmatprep.subr.bf16.mxu0 0
        %980 = vmatpush1.bf16.msra.mxu0 0
        %981 = vmatprep.subr.bf16.mxu0 0
        %982 = vmatpush1.bf16.msra.mxu0 0
        %983 = vmatprep.subr.bf16.mxu0 0
        %984 = vmatpush1.bf16.msra.mxu0 0
        %985 = vmatprep.subr.bf16.mxu0 0
        %986 = vmatpush1.bf16.msra.mxu0 0
        %987 = vmatprep.subr.bf16.mxu0 0
        %988 = vmatpush1.bf16.msra.mxu0 0
        %989 = vmatprep.subr.bf16.mxu0 0
        %990 = vmatpush1.bf16.msra.mxu0 0
        %991 = vmatprep.subr.bf16.mxu0 0
        %992 = vmatpush1.bf16.msra.mxu0 0
        %993 = vmatprep.subr.bf16.mxu0 0
        %994 = vmatpush1.bf16.msra.mxu0 0
        %995 = vmatprep.subr.bf16.mxu0 0
        %996 = vmatpush1.bf16.msra.mxu0 0
        %997 = vmatprep.subr.bf16.mxu0 0
        %998 = vmatpush1.bf16.msra.mxu0 0
        %999 = vmatprep.mubr.bf16.mxu0 0
        %1000 = vmatmul.mubr.bf16.gmra.mrb[0].mxu0 %v965
        %v1001 = vpop.f32.mrb[0].mxu0
        %v1002 = vadd.f32 0.0, %v1001
        %v1003 = vpop.f32.mrb[0].mxu0
        %v1004 = vpop.f32.mrb[0].mxu0
        %v1005 = vpop.f32.mrb[0].mxu0
        %1006 = vdwg.mxu0
        %v1007 = vadd.f32 %v673, %v1002
        %v1008 = vld [vmem:[#allocation11] sm:$0x1]
        %v1009 = vld [vmem:[#allocation13] sm:$0x1]
        %v1010 = vsel %vm691, %v1007, 0.0
        %1011 = vadd.xlane.f32.xlu0 %v1010
        %v1012 = vpop.xlane.xlu0 %1011
        %v1013 = vmul.f32 %v1012, %v695
        %v1014 = vsub.f32 %v1007, %v1013
        %v1015 = vmul.f32 %v1014, %v1014
        %v1016 = vsel %vm691, %v1015, 0.0
        %1017 = vadd.xlane.f32.xlu0 %v1016
        %v1018 = vpop.xlane.xlu0 %1017
        %v1019 = vmul.f32 %v1018, %v695
        %v1020 = vadd.f32 %v1019, 1e-05
        %v1021 = vrsqrt.pop %v1020
        %v1022 = vmul.f32 %v1014, %v1021
        %v1024 = vlaneseq
        %v1025 = vshrl.u32 %v1024, 7
        %v1026 = vsub.s32 0, %v1025
        %v1027 = vrot.slane %v1008, %v1026
        %v1029 = vmul.f32 %v1022, %v1027
        %v1031 = vlaneseq
        %v1032 = vshrl.u32 %v1031, 7
        %v1033 = vsub.s32 0, %v1032
        %v1034 = vrot.slane %v1009, %v1033
        %v1036 = vadd.f32 %v1029, %v1034
        %v1037 = vrot.slane %v1036, 7
        %v1038 = vsel %vm688, %v1037, 0.0
        %v1039 = vsub.f32 %v1036, %v1038
        %v1040 = vld [vmem:[#allocation14] sm:$0x1]
        %v1042 = vlaneseq
        %v1043 = vshrl.u32 %v1042, 7
        %v1044 = vsub.s32 0, %v1043
        %v1045 = vrot.slane %v1040, %v1044
        %v1047 = vmul.f32 %v1039, %v1045
        %v1048 = vadd.f32 %v1038, %v1047
        %v1049 = vld [vmem:[%s14] sm:$0x1]
        %v1051 = vlaneseq
        %v1052 = vshrl.u32 %v1051, 7
        %v1053 = vsub.s32 0, %v1052
        %v1054 = vrot.slane %v1049, %v1053
        %v1056 = vmul.f32 %v1039, %v1054
        %v1057 = vadd.f32 %v1038, %v1056
        %v1058 = vpack.c.bf16 %v1048, %v1048
        %v1059 = vld [vmem:[%s15] sm:$0xf]
        %v1060 = vld [vmem:[%s15 + $0x4] sm:$0xf]
        %v1061 = vld [vmem:[%s15 + $0x8] sm:$0xf]
        %v1062 = vld [vmem:[%s15 + $0xc] sm:$0xf]
        %v1067 = vunpack.c.l.b16 %v1059
        %v1068 = vunpack.c.l.b16 %v1060
        %v1069 = vunpack.c.l.b16 %v1061
        %v1070 = vunpack.c.l.b16 %v1062
        %v1071 = vpack.c.b16 %v1068, %v1067
        %v1072 = vpack.c.b16 %v1070, %v1069
        %v1076 = vsel %vm691, %v1058, 0
        %1078 = vmatprep.subr.bf16.mxu0 0
        %1079 = vmatpush1.bf16.msra.mxu0 %v1071
        %1080 = vmatprep.subr.bf16.mxu0 0
        %1081 = vmatpush1.bf16.msra.mxu0 %v1072
        %1082 = vmatprep.subr.bf16.mxu0 0
        %1083 = vmatpush1.bf16.msra.mxu0 0
        %1084 = vmatprep.subr.bf16.mxu0 0
        %1085 = vmatpush1.bf16.msra.mxu0 0
        %1086 = vmatprep.subr.bf16.mxu0 0
        %1087 = vmatpush1.bf16.msra.mxu0 0
        %1088 = vmatprep.subr.bf16.mxu0 0
        %1089 = vmatpush1.bf16.msra.mxu0 0
        %1090 = vmatprep.subr.bf16.mxu0 0
        %1091 = vmatpush1.bf16.msra.mxu0 0
        %1092 = vmatprep.subr.bf16.mxu0 0
        %1093 = vmatpush1.bf16.msra.mxu0 0
        %1094 = vmatprep.subr.bf16.mxu0 0
        %1095 = vmatpush1.bf16.msra.mxu0 0
        %1096 = vmatprep.subr.bf16.mxu0 0
        %1097 = vmatpush1.bf16.msra.mxu0 0
        %1098 = vmatprep.subr.bf16.mxu0 0
        %1099 = vmatpush1.bf16.msra.mxu0 0
        %1100 = vmatprep.subr.bf16.mxu0 0
        %1101 = vmatpush1.bf16.msra.mxu0 0
        %1102 = vmatprep.subr.bf16.mxu0 0
        %1103 = vmatpush1.bf16.msra.mxu0 0
        %1104 = vmatprep.subr.bf16.mxu0 0
        %1105 = vmatpush1.bf16.msra.mxu0 0
        %1106 = vmatprep.subr.bf16.mxu0 0
        %1107 = vmatpush1.bf16.msra.mxu0 0
        %1108 = vmatprep.subr.bf16.mxu0 0
        %1109 = vmatpush1.bf16.msra.mxu0 0
        %1110 = vmatprep.mubr.bf16.mxu0 0
        %1111 = vmatmul.mubr.bf16.gmra.mrb[0].mxu0 %v1076
        %v1112 = vpop.f32.mrb[0].mxu0
        %v1113 = vadd.f32 0.0, %v1112
        %v1114 = vpop.f32.mrb[0].mxu0
        %v1115 = vpop.f32.mrb[0].mxu0
        %v1116 = vpop.f32.mrb[0].mxu0
        %1117 = vdwg.mxu0
        %v1118 = vsub.f32 0.0, %v1113
        %v1119 = vmul.f32 %v1118, 1.442695
        %v1120 = vpow.pop %v1119
        %v1121 = vadd.f32 %v1120, 1.0
        %v1122 = vrcp.pop %v1121
        %v1123 = vmul.f32 %v1113, %v1122
        %v1124 = vpack.c.bf16 %v1123, %v1123
        %v1125 = vld [vmem:[%s16] sm:$0xf]
        %v1126 = vld [vmem:[%s16 + $0x4] sm:$0xf]
        %v1127 = vld [vmem:[%s16 + $0x8] sm:$0xf]
        %v1128 = vld [vmem:[%s16 + $0xc] sm:$0xf]
        %v1129 = vld [vmem:[%s16 + $0x10] sm:$0xf]
        %v1130 = vld [vmem:[%s16 + $0x14] sm:$0xf]
        %v1131 = vld [vmem:[%s16 + $0x18] sm:$0xf]
        %v1132 = vld [vmem:[%s16 + $0x1c] sm:$0xf]
        %v1133 = vld [vmem:[%s16 + $0x20] sm:$0xf]
        %v1134 = vld [vmem:[%s16 + $0x24] sm:$0xf]
        %v1135 = vld [vmem:[%s16 + $0x28] sm:$0xf]
        %v1136 = vld [vmem:[%s16 + $0x2c] sm:$0xf]
        %v1137 = vld [vmem:[%s16 + $0x30] sm:$0xf]
        %v1138 = vld [vmem:[%s16 + $0x34] sm:$0xf]
        %v1139 = vld [vmem:[%s16 + $0x38] sm:$0xf]
        %v1140 = vld [vmem:[%s16 + $0x3c] sm:$0xf]
        %v1157 = vunpack.c.l.b16 %v1125
        %v1158 = vunpack.c.l.b16 %v1126
        %v1159 = vunpack.c.l.b16 %v1127
        %v1160 = vunpack.c.l.b16 %v1128
        %v1161 = vunpack.c.l.b16 %v1129
        %v1162 = vunpack.c.l.b16 %v1130
        %v1163 = vunpack.c.l.b16 %v1131
        %v1164 = vunpack.c.l.b16 %v1132
        %v1165 = vunpack.c.l.b16 %v1133
        %v1166 = vunpack.c.l.b16 %v1134
        %v1167 = vunpack.c.l.b16 %v1135
        %v1168 = vunpack.c.l.b16 %v1136
        %v1169 = vunpack.c.l.b16 %v1137
        %v1170 = vunpack.c.l.b16 %v1138
        %v1171 = vunpack.c.l.b16 %v1139
        %v1172 = vunpack.c.l.b16 %v1140
        %v1173 = vpack.c.b16 %v1158, %v1157
        %v1174 = vpack.c.b16 %v1160, %v1159
        %v1175 = vpack.c.b16 %v1162, %v1161
        %v1176 = vpack.c.b16 %v1164, %v1163
        %v1177 = vpack.c.b16 %v1166, %v1165
        %v1178 = vpack.c.b16 %v1168, %v1167
        %v1179 = vpack.c.b16 %v1170, %v1169
        %v1180 = vpack.c.b16 %v1172, %v1171
        %1189 = vmatprep.subr.bf16.mxu0 0
        %1190 = vmatpush1.bf16.msra.mxu0 %v1173
        %1191 = vmatprep.subr.bf16.mxu0 0
        %1192 = vmatpush1.bf16.msra.mxu0 %v1174
        %1193 = vmatprep.subr.bf16.mxu0 0
        %1194 = vmatpush1.bf16.msra.mxu0 %v1175
        %1195 = vmatprep.subr.bf16.mxu0 0
        %1196 = vmatpush1.bf16.msra.mxu0 %v1176
        %1197 = vmatprep.subr.bf16.mxu0 0
        %1198 = vmatpush1.bf16.msra.mxu0 %v1177
        %1199 = vmatprep.subr.bf16.mxu0 0
        %1200 = vmatpush1.bf16.msra.mxu0 %v1178
        %1201 = vmatprep.subr.bf16.mxu0 0
        %1202 = vmatpush1.bf16.msra.mxu0 %v1179
        %1203 = vmatprep.subr.bf16.mxu0 0
        %1204 = vmatpush1.bf16.msra.mxu0 %v1180
        %1205 = vmatprep.subr.bf16.mxu0 0
        %1206 = vmatpush1.bf16.msra.mxu0 0
        %1207 = vmatprep.subr.bf16.mxu0 0
        %1208 = vmatpush1.bf16.msra.mxu0 0
        %1209 = vmatprep.subr.bf16.mxu0 0
        %1210 = vmatpush1.bf16.msra.mxu0 0
        %1211 = vmatprep.subr.bf16.mxu0 0
        %1212 = vmatpush1.bf16.msra.mxu0 0
        %1213 = vmatprep.subr.bf16.mxu0 0
        %1214 = vmatpush1.bf16.msra.mxu0 0
        %1215 = vmatprep.subr.bf16.mxu0 0
        %1216 = vmatpush1.bf16.msra.mxu0 0
        %1217 = vmatprep.subr.bf16.mxu0 0
        %1218 = vmatpush1.bf16.msra.mxu0 0
        %1219 = vmatprep.subr.bf16.mxu0 0
        %1220 = vmatpush1.bf16.msra.mxu0 0
        %1221 = vmatprep.mubr.bf16.mxu0 0
        %1222 = vmatmul.mubr.bf16.gmra.mrb[0].mxu0 %v1124
        %v1223 = vpop.f32.mrb[0].mxu0
        %v1224 = vadd.f32 0.0, %v1223
        %v1225 = vpop.f32.mrb[0].mxu0
        %v1226 = vpop.f32.mrb[0].mxu0
        %v1227 = vpop.f32.mrb[0].mxu0
        %1228 = vdwg.mxu0
        %v1229 = vpack.c.bf16 %v1057, %v1057
        %v1230 = vld [vmem:[%s17] sm:$0xf]
        %v1231 = vld [vmem:[%s17 + $0x4] sm:$0xf]
        %v1232 = vld [vmem:[%s17 + $0x8] sm:$0xf]
        %v1233 = vld [vmem:[%s17 + $0xc] sm:$0xf]
        %v1238 = vunpack.c.l.b16 %v1230
        %v1239 = vunpack.c.l.b16 %v1231
        %v1240 = vunpack.c.l.b16 %v1232
        %v1241 = vunpack.c.l.b16 %v1233
        %v1242 = vpack.c.b16 %v1239, %v1238
        %v1243 = vpack.c.b16 %v1241, %v1240
        %v1247 = vsel %vm691, %v1229, 0
        %1249 = vmatprep.subr.bf16.mxu0 0
        %1250 = vmatpush1.bf16.msra.mxu0 %v1242
        %1251 = vmatprep.subr.bf16.mxu0 0
        %1252 = vmatpush1.bf16.msra.mxu0 %v1243
        %1253 = vmatprep.subr.bf16.mxu0 0
        %1254 = vmatpush1.bf16.msra.mxu0 0
        %1255 = vmatprep.subr.bf16.mxu0 0
        %1256 = vmatpush1.bf16.msra.mxu0 0
        %1257 = vmatprep.subr.bf16.mxu0 0
        %1258 = vmatpush1.bf16.msra.mxu0 0
        %1259 = vmatprep.subr.bf16.mxu0 0
        %1260 = vmatpush1.bf16.msra.mxu0 0
        %1261 = vmatprep.subr.bf16.mxu0 0
        %1262 = vmatpush1.bf16.msra.mxu0 0
        %1263 = vmatprep.subr.bf16.mxu0 0
        %1264 = vmatpush1.bf16.msra.mxu0 0
        %1265 = vmatprep.subr.bf16.mxu0 0
        %1266 = vmatpush1.bf16.msra.mxu0 0
        %1267 = vmatprep.subr.bf16.mxu0 0
        %1268 = vmatpush1.bf16.msra.mxu0 0
        %1269 = vmatprep.subr.bf16.mxu0 0
        %1270 = vmatpush1.bf16.msra.mxu0 0
        %1271 = vmatprep.subr.bf16.mxu0 0
        %1272 = vmatpush1.bf16.msra.mxu0 0
        %1273 = vmatprep.subr.bf16.mxu0 0
        %1274 = vmatpush1.bf16.msra.mxu0 0
        %1275 = vmatprep.subr.bf16.mxu0 0
        %1276 = vmatpush1.bf16.msra.mxu0 0
        %1277 = vmatprep.subr.bf16.mxu0 0
        %1278 = vmatpush1.bf16.msra.mxu0 0
        %1279 = vmatprep.subr.bf16.mxu0 0
        %1280 = vmatpush1.bf16.msra.mxu0 0
        %1281 = vmatprep.mubr.bf16.mxu0 0
        %1282 = vmatmul.mubr.bf16.gmra.mrb[0].mxu0 %v1247
        %v1283 = vpop.f32.mrb[0].mxu0
        %v1284 = vadd.f32 0.0, %v1283
        %v1285 = vpop.f32.mrb[0].mxu0
        %v1286 = vpop.f32.mrb[0].mxu0
        %v1287 = vpop.f32.mrb[0].mxu0
        %1288 = vdwg.mxu0
        %v1289 = vsub.f32 0.0, %v1284
        %v1290 = vmul.f32 %v1289, 1.442695
        %v1291 = vpow.pop %v1290
        %v1292 = vadd.f32 %v1291, 1.0
        %v1293 = vrcp.pop %v1292
        %v1294 = vmul.f32 %v1293, %v1224
        %v1295 = vadd.f32 %v1007, %v1294
        %1296 = vst.msk [vmem:[%s667] sm:$0xff] %vm691, %v1295
        %s1297 = sand.u32 %s428, 1
        %s1298 = scalar_lea.sflag [#allocation4], %s1297
        %s1299 = sand.u32 %s428, 1
        %s1300 = smul.addr %s1299, 8
        %s1301 = scalar_lea.vmem [#allocation16], %s1300
        // Predicated region
        $region125: #{tpu_custom_call.1} parent=91 // pred_check
          %p1302 = pneg %p438
        $region126: #{tpu_custom_call.1} parent=91 // pred_check_branch
          %1304 = sbr.rel (%p1302) target = $region128
        $region127: #{tpu_custom_call.1} parent=91 // pred_region
          %s1306 = ssub.s32 128, 128
          %1307 = vsyncadd %s1298, %s1306
          %s1308 = smul.addr %s37, 128
          %s1309 = scalar_lea.hbm %s18, %s1308
          %s1311 = sshll.u32 %s1301, 4
          %s1312 = int_to_ptr.vmem [resolvable:$true] %s1311
          %1314 = dma.vmem_to_hbm [thread:$0]  %s1312, 128, %s1309, %s1298
        $region128: #{tpu_custom_call.1} parent=91 // pred_fallthru
          _
      $region92: #{tpu_custom_call.1} parent=5 // pred_fallthru
        _
      %p1315 = scmp.le.s32.totalorder 2, %s32
      // Predicated region
      $region129: #{tpu_custom_call.1} parent=5 // pred_check
        %p1316 = pneg %p1315
      $region130: #{tpu_custom_call.1} parent=5 // pred_check_branch
        %1318 = sbr.rel (%p1316) target = $region132
      $region131: #{tpu_custom_call.1} parent=5 // pred_region
        %s1319 = ssub.s32 %s32, 2
        // Predicated region
        $region133: #{tpu_custom_call.1} parent=131 // pred_check
          %p1320 = pneg %p444
        $region134: #{tpu_custom_call.1} parent=131 // pred_check_branch
          %1322 = sbr.rel (%p1320) target = $region136
        $region135: #{tpu_custom_call.1} parent=131 // pred_region
          %s1323 = sand.u32 %s429, 1
          %s1324 = scalar_lea.sflag [#allocation4], %s1323
          %s1325 = sand.u32 %s429, 1
          %s1326 = smul.addr %s1325, 8
          %s1327 = scalar_lea.vmem [#allocation16], %s1326
          %1328 = dma.done %s1324, 128
        $region136: #{tpu_custom_call.1} parent=131 // pred_fallthru
          _
      $region132: #{tpu_custom_call.1} parent=5 // pred_fallthru
        _
    $region6: #{tpu_custom_call.1} parent=1 // loop_footer
      %s36 = sadd.s32 1, %s32
    $region7: #{tpu_custom_call.1} parent=1 // loop_footer_branch
      %31 = sbr.rel target = $region3
    $region8: #{tpu_custom_call.1} parent=1 // loop_exit
      _
    %1329 = vsyncpa [#allocation3], 1
    %s1330 = scalar_lea.sflag [#allocation3], 1
    %1331 = vsyncpa %s1330, 1
    %1332 = vsyncpa [#allocation6], 1
    %1333 = vsyncpa [#allocation9], 1
    %1334 = vsyncpa [#allocation12], 1
    %1335 = vsyncpa [#allocation15], 1
    %1336 = vsyncpa [#allocation4], 1
    %s1337 = scalar_lea.sflag [#allocation4], 1
    %1338 = vsyncpa %s1337, 1

</llo_original>
